<compile_context>
chip_gen: v6e
topology: v6e:2x2x1
jax: 0.10.0
libtpu: 0.0.40
codegen_flags: <defaults>
</compile_context>

<pallas_src>
import functools

import jax
import jax.numpy as jnp
import numpy as np
from jax import lax
from jax.experimental import pallas as pl
from jax.experimental.pallas import tpu as pltpu


def _self_attention_kernel(x_ref, wq_ref, wk_ref, wv_ref, wu_ref, bu_ref, o_ref,
                           *, heads, k_dim):
    # x_ref block: (1, t, k)
    x = x_ref[0].astype(jnp.bfloat16)                                   # (t, k)

    # Fused projections: one wide matmul each, N = heads*k (=256).
    # 1/sqrt(k) scaling for q·k^T is already folded into wq on the host.
    q_all = jnp.dot(x, wq_ref[...], preferred_element_type=jnp.float32)  # (t, H*K)
    k_all = jnp.dot(x, wk_ref[...], preferred_element_type=jnp.float32)  # (t, H*K)
    v_all = jnp.dot(x, wv_ref[...], preferred_element_type=jnp.float32)  # (t, H*K)

    outs = []
    for h in range(heads):   # static unroll; per-head live set is tiny at these shapes
        sl = slice(h * k_dim, (h + 1) * k_dim)
        qh = q_all[:, sl].astype(jnp.bfloat16)                           # (t, k)
        kh = k_all[:, sl].astype(jnp.bfloat16)                           # (t, k)
        vh = v_all[:, sl].astype(jnp.bfloat16)                           # (t, k)

        # scores: contract the feature dim directly ("nt" matmul, no transpose op)
        s = lax.dot_general(qh, kh, (((1,), (1,)), ((), ())),
                            preferred_element_type=jnp.float32)          # (t, t)
        # numerically-stable softmax over last axis (matches F.softmax(dim=2))
        s = s - jnp.max(s, axis=-1, keepdims=True)
        e = jnp.exp(s)
        inv = pl.reciprocal(jnp.sum(e, axis=-1, keepdims=True), approx=True)  # EUP
        oh = jnp.dot(e.astype(jnp.bfloat16), vh,
                     preferred_element_type=jnp.float32)                 # (t, k)
        outs.append(oh * inv)       # deferred softmax normalization ((t,k) multiply)

    # Concatenate heads -> single unify matmul with a heads*k-deep contraction.
    out_cat = jnp.concatenate(outs, axis=-1).astype(jnp.bfloat16)        # (t, H*K)
    y = jnp.dot(out_cat, wu_ref[...], preferred_element_type=jnp.float32)  # (t, k)
    y = y + bu_ref[...]                                                  # bias (1, k)
    o_ref[0] = y.astype(o_ref.dtype)


def self_attention(x, wq, wk, wv, wu, bu, *, heads):
    """x: (b, t, k).  wq/wk/wv: (k*heads, k) PyTorch Linear weights (no bias).
    wu: (k, k*heads), bu: (k,) for unifyheads."""
    b, t, k_dim = x.shape
    hk = heads * k_dim

    # One-time weight prep (plain JAX, outside the kernel):
    #   toqueries(x) = x @ wq.T, and .view(b,t,heads,k) means head h owns
    #   feature columns [h*k, (h+1)*k) of the wide (t, heads*k) result.
    #   Fold the full 1/sqrt(k) scale (q and k each get k^-1/4) into Wq only.
    #   Cast weights to bf16 for the MXU; accumulation stays f32 in-kernel.
    inv_sqrt_k = 1.0 / (float(k_dim) ** 0.5)
    wq_all = (wq.T * inv_sqrt_k).astype(jnp.bfloat16)      # (k, heads*k)
    wk_all = wk.T.astype(jnp.bfloat16)                     # (k, heads*k)
    wv_all = wv.T.astype(jnp.bfloat16)                     # (k, heads*k)
    #   unifyheads: y = concat_h(out_h) @ wu.T + bu
    wu_all = wu.T.astype(jnp.bfloat16)                     # (heads*k, k)
    bu_r = bu.reshape(1, k_dim).astype(jnp.float32)

    kernel = functools.partial(_self_attention_kernel, heads=heads, k_dim=k_dim)

    return pl.pallas_call(
        kernel,
        out_shape=jax.ShapeDtypeStruct((b, t, k_dim), x.dtype),
        grid_spec=pltpu.PrefetchScalarGridSpec(
            num_scalar_prefetch=0,
            grid=(b,),   # one batch element per step; "parallel" -> both v7x TCs used
            in_specs=[
                pl.BlockSpec((1, t, k_dim), lambda i: (i, 0, 0)),   # x
                pl.BlockSpec((k_dim, hk), lambda i: (0, 0)),        # wq_all (scaled)
                pl.BlockSpec((k_dim, hk), lambda i: (0, 0)),        # wk_all
                pl.BlockSpec((k_dim, hk), lambda i: (0, 0)),        # wv_all
                pl.BlockSpec((hk, k_dim), lambda i: (0, 0)),        # wu_all
                pl.BlockSpec((1, k_dim), lambda i: (0, 0)),         # bias
            ],
            out_specs=pl.BlockSpec((1, t, k_dim), lambda i: (i, 0, 0)),
        ),
        compiler_params=pltpu.CompilerParams(
            dimension_semantics=("parallel",)),
    )(x, wq_all, wk_all, wv_all, wu_all, bu_r)


def _reference(x, wq, wk, wv, wu, bu, *, heads):
    """Pure-JAX (f32) replica of the PyTorch forward, for verification."""
    b, t, k_dim = x.shape
    q = (x @ wq.T).reshape(b, t, heads, k_dim)
    kk = (x @ wk.T).reshape(b, t, heads, k_dim)
    v = (x @ wv.T).reshape(b, t, heads, k_dim)
    q = jnp.transpose(q, (0, 2, 1, 3)).reshape(b * heads, t, k_dim) / k_dim ** 0.25
    kk = jnp.transpose(kk, (0, 2, 1, 3)).reshape(b * heads, t, k_dim) / k_dim ** 0.25
    v = jnp.transpose(v, (0, 2, 1, 3)).reshape(b * heads, t, k_dim)
    dot = jnp.einsum("btk,bsk->bts", q, kk)
    dot = jax.nn.softmax(dot, axis=2)
    out = jnp.einsum("bts,bsk->btk", dot, v).reshape(b, heads, t, k_dim)
    out = jnp.transpose(out, (0, 2, 1, 3)).reshape(b, t, heads * k_dim)
    return out @ wu.T + bu


if __name__ == "__main__":
    B, T, K, HEADS = 2, 8, 32, 8

    key = jax.random.PRNGKey(0)
    kx, k1, k2, k3, k4, k5 = jax.random.split(key, 6)

    x = jax.random.normal(kx, (B, T, K), dtype=jnp.float32)
    # Deterministic "Linear" parameters (shapes match nn.Linear conventions).
    wq = jax.random.normal(k1, (K * HEADS, K), dtype=jnp.float32) * 0.05
    wk = jax.random.normal(k2, (K * HEADS, K), dtype=jnp.float32) * 0.05
    wv = jax.random.normal(k3, (K * HEADS, K), dtype=jnp.float32) * 0.05
    wu = jax.random.normal(k4, (K, K * HEADS), dtype=jnp.float32) * 0.05
    bu = jax.random.normal(k5, (K,), dtype=jnp.float32) * 0.05

    out = self_attention(x, wq, wk, wv, wu, bu, heads=HEADS)
    out = jax.block_until_ready(out)

    ref = _reference(x, wq, wk, wv, wu, bu, heads=HEADS)
    # Tolerance loosened vs the f32-only version: bf16 MXU operands + approx
    # reciprocal in the softmax intentionally change numerics slightly.
    np.testing.assert_allclose(np.asarray(out), np.asarray(ref), rtol=3e-2, atol=3e-2)

    print("KERNEL_OK")
</pallas_src>

<mosaic_0001>
module attributes {stable_mosaic.version = 11 : i64} {
  func.func @_self_attention_kernel(%arg0: i32, %arg1: memref<1x8x32xf32, #tpu.memory_space<vmem>>, %arg2: memref<32x256xbf16, #tpu.memory_space<vmem>>, %arg3: memref<32x256xbf16, #tpu.memory_space<vmem>>, %arg4: memref<32x256xbf16, #tpu.memory_space<vmem>>, %arg5: memref<256x32xbf16, #tpu.memory_space<vmem>>, %arg6: memref<1x32xf32, #tpu.memory_space<vmem>>, %arg7: memref<1x8x32xf32, #tpu.memory_space<vmem>>) attributes {dimension_semantics = [#tpu.dimension_semantics<parallel>], iteration_bounds = array<i64: 2>, scalar_prefetch = 0 : i64, scratch_operands = 0 : i64, tpu.core_type = #tpu.core_type<tc>, window_params = [{transform_indices = @transform_0, window_bounds = array<i64: 1, 8, 32>}, {pipeline_mode = #tpu.pipeline_mode<synchronous>, transform_indices = @transform_1, window_bounds = array<i64: 32, 256>}, {pipeline_mode = #tpu.pipeline_mode<synchronous>, transform_indices = @transform_2, window_bounds = array<i64: 32, 256>}, {pipeline_mode = #tpu.pipeline_mode<synchronous>, transform_indices = @transform_3, window_bounds = array<i64: 32, 256>}, {pipeline_mode = #tpu.pipeline_mode<synchronous>, transform_indices = @transform_4, window_bounds = array<i64: 256, 32>}, {pipeline_mode = #tpu.pipeline_mode<synchronous>, transform_indices = @transform_5, window_bounds = array<i64: 1, 32>}, {transform_indices = @transform_6, window_bounds = array<i64: 1, 8, 32>}]} {
    %c0 = arith.constant 0 : index
    %c0_0 = arith.constant 0 : index
    %c0_1 = arith.constant 0 : index
    %0 = vector.load %arg1[%c0, %c0_0, %c0_1] : memref<1x8x32xf32, #tpu.memory_space<vmem>>, vector<1x8x32xf32>
    %1 = vector.shape_cast %0 : vector<1x8x32xf32> to vector<8x32xf32>
    %2 = arith.truncf %1 : vector<8x32xf32> to vector<8x32xbf16>
    %c0_2 = arith.constant 0 : index
    %c0_3 = arith.constant 0 : index
    %3 = vector.load %arg2[%c0_2, %c0_3] : memref<32x256xbf16, #tpu.memory_space<vmem>>, vector<32x256xbf16>
    %cst = arith.constant dense<0.000000e+00> : vector<8x256xf32>
    %4 = tpu.matmul %2, %3, %cst {dimension_numbers = #tpu.dot_dimension_numbers<[1], [0], [0], [1], [0, 0, 1, 1], [], []>} : vector<8x32xbf16>, vector<32x256xbf16>, vector<8x256xf32> -> vector<8x256xf32>
    %c0_4 = arith.constant 0 : index
    %c0_5 = arith.constant 0 : index
    %5 = vector.load %arg3[%c0_4, %c0_5] : memref<32x256xbf16, #tpu.memory_space<vmem>>, vector<32x256xbf16>
    %cst_6 = arith.constant dense<0.000000e+00> : vector<8x256xf32>
    %6 = tpu.matmul %2, %5, %cst_6 {dimension_numbers = #tpu.dot_dimension_numbers<[1], [0], [0], [1], [0, 0, 1, 1], [], []>} : vector<8x32xbf16>, vector<32x256xbf16>, vector<8x256xf32> -> vector<8x256xf32>
    %c0_7 = arith.constant 0 : index
    %c0_8 = arith.constant 0 : index
    %7 = vector.load %arg4[%c0_7, %c0_8] : memref<32x256xbf16, #tpu.memory_space<vmem>>, vector<32x256xbf16>
    %cst_9 = arith.constant dense<0.000000e+00> : vector<8x256xf32>
    %8 = tpu.matmul %2, %7, %cst_9 {dimension_numbers = #tpu.dot_dimension_numbers<[1], [0], [0], [1], [0, 0, 1, 1], [], []>} : vector<8x32xbf16>, vector<32x256xbf16>, vector<8x256xf32> -> vector<8x256xf32>
    %9 = vector.extract_strided_slice %4 {offsets = [0, 0], sizes = [8, 32], strides = [1, 1]} : vector<8x256xf32> to vector<8x32xf32>
    %10 = arith.truncf %9 : vector<8x32xf32> to vector<8x32xbf16>
    %11 = vector.extract_strided_slice %6 {offsets = [0, 0], sizes = [8, 32], strides = [1, 1]} : vector<8x256xf32> to vector<8x32xf32>
    %12 = arith.truncf %11 : vector<8x32xf32> to vector<8x32xbf16>
    %13 = vector.extract_strided_slice %8 {offsets = [0, 0], sizes = [8, 32], strides = [1, 1]} : vector<8x256xf32> to vector<8x32xf32>
    %14 = arith.truncf %13 : vector<8x32xf32> to vector<8x32xbf16>
    %cst_10 = arith.constant dense<0.000000e+00> : vector<8x8xf32>
    %15 = tpu.matmul %10, %12, %cst_10 {dimension_numbers = #tpu.dot_dimension_numbers<[1], [1], [0], [0], [0, 0, 1, 0], [], []>} : vector<8x32xbf16>, vector<8x32xbf16>, vector<8x8xf32> -> vector<8x8xf32>
    %cst_11 = arith.constant dense<0xFF800000> : vector<8xf32>
    %16 = vector.multi_reduction <maximumf>, %15, %cst_11 [1] : vector<8x8xf32> to vector<8xf32>
    %17 = vector.shape_cast %16 : vector<8xf32> to vector<8x1xf32>
    %18 = vector.broadcast %17 : vector<8x1xf32> to vector<8x8xf32>
    %19 = arith.subf %15, %18 : vector<8x8xf32>
    %20 = math.exp %19 : vector<8x8xf32>
    %cst_12 = arith.constant dense<0.000000e+00> : vector<8xf32>
    %21 = vector.multi_reduction <add>, %20, %cst_12 [1] : vector<8x8xf32> to vector<8xf32>
    %22 = vector.shape_cast %21 : vector<8xf32> to vector<8x1xf32>
    %23 = tpu.reciprocal %22 {approx = true} : vector<8x1xf32> -> vector<8x1xf32>
    %24 = arith.truncf %20 : vector<8x8xf32> to vector<8x8xbf16>
    %cst_13 = arith.constant dense<0.000000e+00> : vector<8x32xf32>
    %25 = tpu.matmul %24, %14, %cst_13 {dimension_numbers = #tpu.dot_dimension_numbers<[1], [0], [0], [1], [0, 0, 1, 1], [], []>} : vector<8x8xbf16>, vector<8x32xbf16>, vector<8x32xf32> -> vector<8x32xf32>
    %26 = vector.broadcast %23 : vector<8x1xf32> to vector<8x32xf32>
    %27 = arith.mulf %25, %26 : vector<8x32xf32>
    %28 = vector.extract_strided_slice %4 {offsets = [0, 32], sizes = [8, 32], strides = [1, 1]} : vector<8x256xf32> to vector<8x32xf32>
    %29 = arith.truncf %28 : vector<8x32xf32> to vector<8x32xbf16>
    %30 = vector.extract_strided_slice %6 {offsets = [0, 32], sizes = [8, 32], strides = [1, 1]} : vector<8x256xf32> to vector<8x32xf32>
    %31 = arith.truncf %30 : vector<8x32xf32> to vector<8x32xbf16>
    %32 = vector.extract_strided_slice %8 {offsets = [0, 32], sizes = [8, 32], strides = [1, 1]} : vector<8x256xf32> to vector<8x32xf32>
    %33 = arith.truncf %32 : vector<8x32xf32> to vector<8x32xbf16>
    %cst_14 = arith.constant dense<0.000000e+00> : vector<8x8xf32>
    %34 = tpu.matmul %29, %31, %cst_14 {dimension_numbers = #tpu.dot_dimension_numbers<[1], [1], [0], [0], [0, 0, 1, 0], [], []>} : vector<8x32xbf16>, vector<8x32xbf16>, vector<8x8xf32> -> vector<8x8xf32>
    %cst_15 = arith.constant dense<0xFF800000> : vector<8xf32>
    %35 = vector.multi_reduction <maximumf>, %34, %cst_15 [1] : vector<8x8xf32> to vector<8xf32>
    %36 = vector.shape_cast %35 : vector<8xf32> to vector<8x1xf32>
    %37 = vector.broadcast %36 : vector<8x1xf32> to vector<8x8xf32>
    %38 = arith.subf %34, %37 : vector<8x8xf32>
    %39 = math.exp %38 : vector<8x8xf32>
    %cst_16 = arith.constant dense<0.000000e+00> : vector<8xf32>
    %40 = vector.multi_reduction <add>, %39, %cst_16 [1] : vector<8x8xf32> to vector<8xf32>
    %41 = vector.shape_cast %40 : vector<8xf32> to vector<8x1xf32>
    %42 = tpu.reciprocal %41 {approx = true} : vector<8x1xf32> -> vector<8x1xf32>
    %43 = arith.truncf %39 : vector<8x8xf32> to vector<8x8xbf16>
    %cst_17 = arith.constant dense<0.000000e+00> : vector<8x32xf32>
    %44 = tpu.matmul %43, %33, %cst_17 {dimension_numbers = #tpu.dot_dimension_numbers<[1], [0], [0], [1], [0, 0, 1, 1], [], []>} : vector<8x8xbf16>, vector<8x32xbf16>, vector<8x32xf32> -> vector<8x32xf32>
    %45 = vector.broadcast %42 : vector<8x1xf32> to vector<8x32xf32>
    %46 = arith.mulf %44, %45 : vector<8x32xf32>
    %47 = vector.extract_strided_slice %4 {offsets = [0, 64], sizes = [8, 32], strides = [1, 1]} : vector<8x256xf32> to vector<8x32xf32>
    %48 = arith.truncf %47 : vector<8x32xf32> to vector<8x32xbf16>
    %49 = vector.extract_strided_slice %6 {offsets = [0, 64], sizes = [8, 32], strides = [1, 1]} : vector<8x256xf32> to vector<8x32xf32>
    %50 = arith.truncf %49 : vector<8x32xf32> to vector<8x32xbf16>
    %51 = vector.extract_strided_slice %8 {offsets = [0, 64], sizes = [8, 32], strides = [1, 1]} : vector<8x256xf32> to vector<8x32xf32>
    %52 = arith.truncf %51 : vector<8x32xf32> to vector<8x32xbf16>
    %cst_18 = arith.constant dense<0.000000e+00> : vector<8x8xf32>
    %53 = tpu.matmul %48, %50, %cst_18 {dimension_numbers = #tpu.dot_dimension_numbers<[1], [1], [0], [0], [0, 0, 1, 0], [], []>} : vector<8x32xbf16>, vector<8x32xbf16>, vector<8x8xf32> -> vector<8x8xf32>
    %cst_19 = arith.constant dense<0xFF800000> : vector<8xf32>
    %54 = vector.multi_reduction <maximumf>, %53, %cst_19 [1] : vector<8x8xf32> to vector<8xf32>
    %55 = vector.shape_cast %54 : vector<8xf32> to vector<8x1xf32>
    %56 = vector.broadcast %55 : vector<8x1xf32> to vector<8x8xf32>
    %57 = arith.subf %53, %56 : vector<8x8xf32>
    %58 = math.exp %57 : vector<8x8xf32>
    %cst_20 = arith.constant dense<0.000000e+00> : vector<8xf32>
    %59 = vector.multi_reduction <add>, %58, %cst_20 [1] : vector<8x8xf32> to vector<8xf32>
    %60 = vector.shape_cast %59 : vector<8xf32> to vector<8x1xf32>
    %61 = tpu.reciprocal %60 {approx = true} : vector<8x1xf32> -> vector<8x1xf32>
    %62 = arith.truncf %58 : vector<8x8xf32> to vector<8x8xbf16>
    %cst_21 = arith.constant dense<0.000000e+00> : vector<8x32xf32>
    %63 = tpu.matmul %62, %52, %cst_21 {dimension_numbers = #tpu.dot_dimension_numbers<[1], [0], [0], [1], [0, 0, 1, 1], [], []>} : vector<8x8xbf16>, vector<8x32xbf16>, vector<8x32xf32> -> vector<8x32xf32>
    %64 = vector.broadcast %61 : vector<8x1xf32> to vector<8x32xf32>
    %65 = arith.mulf %63, %64 : vector<8x32xf32>
    %66 = vector.extract_strided_slice %4 {offsets = [0, 96], sizes = [8, 32], strides = [1, 1]} : vector<8x256xf32> to vector<8x32xf32>
    %67 = arith.truncf %66 : vector<8x32xf32> to vector<8x32xbf16>
    %68 = vector.extract_strided_slice %6 {offsets = [0, 96], sizes = [8, 32], strides = [1, 1]} : vector<8x256xf32> to vector<8x32xf32>
    %69 = arith.truncf %68 : vector<8x32xf32> to vector<8x32xbf16>
    %70 = vector.extract_strided_slice %8 {offsets = [0, 96], sizes = [8, 32], strides = [1, 1]} : vector<8x256xf32> to vector<8x32xf32>
    %71 = arith.truncf %70 : vector<8x32xf32> to vector<8x32xbf16>
    %cst_22 = arith.constant dense<0.000000e+00> : vector<8x8xf32>
    %72 = tpu.matmul %67, %69, %cst_22 {dimension_numbers = #tpu.dot_dimension_numbers<[1], [1], [0], [0], [0, 0, 1, 0], [], []>} : vector<8x32xbf16>, vector<8x32xbf16>, vector<8x8xf32> -> vector<8x8xf32>
    %cst_23 = arith.constant dense<0xFF800000> : vector<8xf32>
    %73 = vector.multi_reduction <maximumf>, %72, %cst_23 [1] : vector<8x8xf32> to vector<8xf32>
    %74 = vector.shape_cast %73 : vector<8xf32> to vector<8x1xf32>
    %75 = vector.broadcast %74 : vector<8x1xf32> to vector<8x8xf32>
    %76 = arith.subf %72, %75 : vector<8x8xf32>
    %77 = math.exp %76 : vector<8x8xf32>
    %cst_24 = arith.constant dense<0.000000e+00> : vector<8xf32>
    %78 = vector.multi_reduction <add>, %77, %cst_24 [1] : vector<8x8xf32> to vector<8xf32>
    %79 = vector.shape_cast %78 : vector<8xf32> to vector<8x1xf32>
    %80 = tpu.reciprocal %79 {approx = true} : vector<8x1xf32> -> vector<8x1xf32>
    %81 = arith.truncf %77 : vector<8x8xf32> to vector<8x8xbf16>
    %cst_25 = arith.constant dense<0.000000e+00> : vector<8x32xf32>
    %82 = tpu.matmul %81, %71, %cst_25 {dimension_numbers = #tpu.dot_dimension_numbers<[1], [0], [0], [1], [0, 0, 1, 1], [], []>} : vector<8x8xbf16>, vector<8x32xbf16>, vector<8x32xf32> -> vector<8x32xf32>
    %83 = vector.broadcast %80 : vector<8x1xf32> to vector<8x32xf32>
    %84 = arith.mulf %82, %83 : vector<8x32xf32>
    %85 = vector.extract_strided_slice %4 {offsets = [0, 128], sizes = [8, 32], strides = [1, 1]} : vector<8x256xf32> to vector<8x32xf32>
    %86 = arith.truncf %85 : vector<8x32xf32> to vector<8x32xbf16>
    %87 = vector.extract_strided_slice %6 {offsets = [0, 128], sizes = [8, 32], strides = [1, 1]} : vector<8x256xf32> to vector<8x32xf32>
    %88 = arith.truncf %87 : vector<8x32xf32> to vector<8x32xbf16>
    %89 = vector.extract_strided_slice %8 {offsets = [0, 128], sizes = [8, 32], strides = [1, 1]} : vector<8x256xf32> to vector<8x32xf32>
    %90 = arith.truncf %89 : vector<8x32xf32> to vector<8x32xbf16>
    %cst_26 = arith.constant dense<0.000000e+00> : vector<8x8xf32>
    %91 = tpu.matmul %86, %88, %cst_26 {dimension_numbers = #tpu.dot_dimension_numbers<[1], [1], [0], [0], [0, 0, 1, 0], [], []>} : vector<8x32xbf16>, vector<8x32xbf16>, vector<8x8xf32> -> vector<8x8xf32>
    %cst_27 = arith.constant dense<0xFF800000> : vector<8xf32>
    %92 = vector.multi_reduction <maximumf>, %91, %cst_27 [1] : vector<8x8xf32> to vector<8xf32>
    %93 = vector.shape_cast %92 : vector<8xf32> to vector<8x1xf32>
    %94 = vector.broadcast %93 : vector<8x1xf32> to vector<8x8xf32>
    %95 = arith.subf %91, %94 : vector<8x8xf32>
    %96 = math.exp %95 : vector<8x8xf32>
    %cst_28 = arith.constant dense<0.000000e+00> : vector<8xf32>
    %97 = vector.multi_reduction <add>, %96, %cst_28 [1] : vector<8x8xf32> to vector<8xf32>
    %98 = vector.shape_cast %97 : vector<8xf32> to vector<8x1xf32>
    %99 = tpu.reciprocal %98 {approx = true} : vector<8x1xf32> -> vector<8x1xf32>
    %100 = arith.truncf %96 : vector<8x8xf32> to vector<8x8xbf16>
    %cst_29 = arith.constant dense<0.000000e+00> : vector<8x32xf32>
    %101 = tpu.matmul %100, %90, %cst_29 {dimension_numbers = #tpu.dot_dimension_numbers<[1], [0], [0], [1], [0, 0, 1, 1], [], []>} : vector<8x8xbf16>, vector<8x32xbf16>, vector<8x32xf32> -> vector<8x32xf32>
    %102 = vector.broadcast %99 : vector<8x1xf32> to vector<8x32xf32>
    %103 = arith.mulf %101, %102 : vector<8x32xf32>
    %104 = vector.extract_strided_slice %4 {offsets = [0, 160], sizes = [8, 32], strides = [1, 1]} : vector<8x256xf32> to vector<8x32xf32>
    %105 = arith.truncf %104 : vector<8x32xf32> to vector<8x32xbf16>
    %106 = vector.extract_strided_slice %6 {offsets = [0, 160], sizes = [8, 32], strides = [1, 1]} : vector<8x256xf32> to vector<8x32xf32>
    %107 = arith.truncf %106 : vector<8x32xf32> to vector<8x32xbf16>
    %108 = vector.extract_strided_slice %8 {offsets = [0, 160], sizes = [8, 32], strides = [1, 1]} : vector<8x256xf32> to vector<8x32xf32>
    %109 = arith.truncf %108 : vector<8x32xf32> to vector<8x32xbf16>
    %cst_30 = arith.constant dense<0.000000e+00> : vector<8x8xf32>
    %110 = tpu.matmul %105, %107, %cst_30 {dimension_numbers = #tpu.dot_dimension_numbers<[1], [1], [0], [0], [0, 0, 1, 0], [], []>} : vector<8x32xbf16>, vector<8x32xbf16>, vector<8x8xf32> -> vector<8x8xf32>
    %cst_31 = arith.constant dense<0xFF800000> : vector<8xf32>
    %111 = vector.multi_reduction <maximumf>, %110, %cst_31 [1] : vector<8x8xf32> to vector<8xf32>
    %112 = vector.shape_cast %111 : vector<8xf32> to vector<8x1xf32>
    %113 = vector.broadcast %112 : vector<8x1xf32> to vector<8x8xf32>
    %114 = arith.subf %110, %113 : vector<8x8xf32>
    %115 = math.exp %114 : vector<8x8xf32>
    %cst_32 = arith.constant dense<0.000000e+00> : vector<8xf32>
    %116 = vector.multi_reduction <add>, %115, %cst_32 [1] : vector<8x8xf32> to vector<8xf32>
    %117 = vector.shape_cast %116 : vector<8xf32> to vector<8x1xf32>
    %118 = tpu.reciprocal %117 {approx = true} : vector<8x1xf32> -> vector<8x1xf32>
    %119 = arith.truncf %115 : vector<8x8xf32> to vector<8x8xbf16>
    %cst_33 = arith.constant dense<0.000000e+00> : vector<8x32xf32>
    %120 = tpu.matmul %119, %109, %cst_33 {dimension_numbers = #tpu.dot_dimension_numbers<[1], [0], [0], [1], [0, 0, 1, 1], [], []>} : vector<8x8xbf16>, vector<8x32xbf16>, vector<8x32xf32> -> vector<8x32xf32>
    %121 = vector.broadcast %118 : vector<8x1xf32> to vector<8x32xf32>
    %122 = arith.mulf %120, %121 : vector<8x32xf32>
    %123 = vector.extract_strided_slice %4 {offsets = [0, 192], sizes = [8, 32], strides = [1, 1]} : vector<8x256xf32> to vector<8x32xf32>
    %124 = arith.truncf %123 : vector<8x32xf32> to vector<8x32xbf16>
    %125 = vector.extract_strided_slice %6 {offsets = [0, 192], sizes = [8, 32], strides = [1, 1]} : vector<8x256xf32> to vector<8x32xf32>
    %126 = arith.truncf %125 : vector<8x32xf32> to vector<8x32xbf16>
    %127 = vector.extract_strided_slice %8 {offsets = [0, 192], sizes = [8, 32], strides = [1, 1]} : vector<8x256xf32> to vector<8x32xf32>
    %128 = arith.truncf %127 : vector<8x32xf32> to vector<8x32xbf16>
    %cst_34 = arith.constant dense<0.000000e+00> : vector<8x8xf32>
    %129 = tpu.matmul %124, %126, %cst_34 {dimension_numbers = #tpu.dot_dimension_numbers<[1], [1], [0], [0], [0, 0, 1, 0], [], []>} : vector<8x32xbf16>, vector<8x32xbf16>, vector<8x8xf32> -> vector<8x8xf32>
    %cst_35 = arith.constant dense<0xFF800000> : vector<8xf32>
    %130 = vector.multi_reduction <maximumf>, %129, %cst_35 [1] : vector<8x8xf32> to vector<8xf32>
    %131 = vector.shape_cast %130 : vector<8xf32> to vector<8x1xf32>
    %132 = vector.broadcast %131 : vector<8x1xf32> to vector<8x8xf32>
    %133 = arith.subf %129, %132 : vector<8x8xf32>
    %134 = math.exp %133 : vector<8x8xf32>
    %cst_36 = arith.constant dense<0.000000e+00> : vector<8xf32>
    %135 = vector.multi_reduction <add>, %134, %cst_36 [1] : vector<8x8xf32> to vector<8xf32>
    %136 = vector.shape_cast %135 : vector<8xf32> to vector<8x1xf32>
    %137 = tpu.reciprocal %136 {approx = true} : vector<8x1xf32> -> vector<8x1xf32>
    %138 = arith.truncf %134 : vector<8x8xf32> to vector<8x8xbf16>
    %cst_37 = arith.constant dense<0.000000e+00> : vector<8x32xf32>
    %139 = tpu.matmul %138, %128, %cst_37 {dimension_numbers = #tpu.dot_dimension_numbers<[1], [0], [0], [1], [0, 0, 1, 1], [], []>} : vector<8x8xbf16>, vector<8x32xbf16>, vector<8x32xf32> -> vector<8x32xf32>
    %140 = vector.broadcast %137 : vector<8x1xf32> to vector<8x32xf32>
    %141 = arith.mulf %139, %140 : vector<8x32xf32>
    %142 = vector.extract_strided_slice %4 {offsets = [0, 224], sizes = [8, 32], strides = [1, 1]} : vector<8x256xf32> to vector<8x32xf32>
    %143 = arith.truncf %142 : vector<8x32xf32> to vector<8x32xbf16>
    %144 = vector.extract_strided_slice %6 {offsets = [0, 224], sizes = [8, 32], strides = [1, 1]} : vector<8x256xf32> to vector<8x32xf32>
    %145 = arith.truncf %144 : vector<8x32xf32> to vector<8x32xbf16>
    %146 = vector.extract_strided_slice %8 {offsets = [0, 224], sizes = [8, 32], strides = [1, 1]} : vector<8x256xf32> to vector<8x32xf32>
    %147 = arith.truncf %146 : vector<8x32xf32> to vector<8x32xbf16>
    %cst_38 = arith.constant dense<0.000000e+00> : vector<8x8xf32>
    %148 = tpu.matmul %143, %145, %cst_38 {dimension_numbers = #tpu.dot_dimension_numbers<[1], [1], [0], [0], [0, 0, 1, 0], [], []>} : vector<8x32xbf16>, vector<8x32xbf16>, vector<8x8xf32> -> vector<8x8xf32>
    %cst_39 = arith.constant dense<0xFF800000> : vector<8xf32>
    %149 = vector.multi_reduction <maximumf>, %148, %cst_39 [1] : vector<8x8xf32> to vector<8xf32>
    %150 = vector.shape_cast %149 : vector<8xf32> to vector<8x1xf32>
    %151 = vector.broadcast %150 : vector<8x1xf32> to vector<8x8xf32>
    %152 = arith.subf %148, %151 : vector<8x8xf32>
    %153 = math.exp %152 : vector<8x8xf32>
    %cst_40 = arith.constant dense<0.000000e+00> : vector<8xf32>
    %154 = vector.multi_reduction <add>, %153, %cst_40 [1] : vector<8x8xf32> to vector<8xf32>
    %155 = vector.shape_cast %154 : vector<8xf32> to vector<8x1xf32>
    %156 = tpu.reciprocal %155 {approx = true} : vector<8x1xf32> -> vector<8x1xf32>
    %157 = arith.truncf %153 : vector<8x8xf32> to vector<8x8xbf16>
    %cst_41 = arith.constant dense<0.000000e+00> : vector<8x32xf32>
    %158 = tpu.matmul %157, %147, %cst_41 {dimension_numbers = #tpu.dot_dimension_numbers<[1], [0], [0], [1], [0, 0, 1, 1], [], []>} : vector<8x8xbf16>, vector<8x32xbf16>, vector<8x32xf32> -> vector<8x32xf32>
    %159 = vector.broadcast %156 : vector<8x1xf32> to vector<8x32xf32>
    %160 = arith.mulf %158, %159 : vector<8x32xf32>
    %161 = tpu.concatenate %27, %46, %65, %84, %103, %122, %141, %160 in 1 : vector<8x32xf32>, vector<8x32xf32>, vector<8x32xf32>, vector<8x32xf32>, vector<8x32xf32>, vector<8x32xf32>, vector<8x32xf32>, vector<8x32xf32> -> vector<8x256xf32>
    %162 = arith.truncf %161 : vector<8x256xf32> to vector<8x256xbf16>
    %c0_42 = arith.constant 0 : index
    %c0_43 = arith.constant 0 : index
    %163 = vector.load %arg5[%c0_42, %c0_43] : memref<256x32xbf16, #tpu.memory_space<vmem>>, vector<256x32xbf16>
    %cst_44 = arith.constant dense<0.000000e+00> : vector<8x32xf32>
    %164 = tpu.matmul %162, %163, %cst_44 {dimension_numbers = #tpu.dot_dimension_numbers<[1], [0], [0], [1], [0, 0, 1, 1], [], []>} : vector<8x256xbf16>, vector<256x32xbf16>, vector<8x32xf32> -> vector<8x32xf32>
    %c0_45 = arith.constant 0 : index
    %c0_46 = arith.constant 0 : index
    %165 = vector.load %arg6[%c0_45, %c0_46] : memref<1x32xf32, #tpu.memory_space<vmem>>, vector<1x32xf32>
    %166 = vector.broadcast %165 : vector<1x32xf32> to vector<8x32xf32>
    %167 = arith.addf %164, %166 : vector<8x32xf32>
    %c0_47 = arith.constant 0 : index
    %c0_48 = arith.constant 0 : index
    %c0_49 = arith.constant 0 : index
    %168 = vector.load %arg7[%c0_47, %c0_48, %c0_49] : memref<1x8x32xf32, #tpu.memory_space<vmem>>, vector<1x8x32xf32>
    %169 = vector.shape_cast %168 : vector<1x8x32xf32> to vector<8x32xf32>
    %170 = vector.shape_cast %167 : vector<8x32xf32> to vector<1x8x32xf32>
    tpu.vector_store %arg7[%c0_47, %c0_48, %c0_49], %170 {strides = array<i32>} : memref<1x8x32xf32, #tpu.memory_space<vmem>>, vector<1x8x32xf32>,
    return
  }
  func.func @transform_0(%arg0: i32) -> (i32, i32, i32) {
    %c0_i32 = arith.constant 0 : i32
    %c0_i32_0 = arith.constant 0 : i32
    %c0_i32_1 = arith.constant 0 : i32
    return %arg0, %c0_i32, %c0_i32_0 : i32, i32, i32
  }
  func.func @transform_1(%arg0: i32) -> (i32, i32) {
    %c0_i32 = arith.constant 0 : i32
    %c0_i32_0 = arith.constant 0 : i32
    %c0_i32_1 = arith.constant 0 : i32
    return %c0_i32, %c0_i32_0 : i32, i32
  }
  func.func @transform_2(%arg0: i32) -> (i32, i32) {
    %c0_i32 = arith.constant 0 : i32
    %c0_i32_0 = arith.constant 0 : i32
    %c0_i32_1 = arith.constant 0 : i32
    return %c0_i32, %c0_i32_0 : i32, i32
  }
  func.func @transform_3(%arg0: i32) -> (i32, i32) {
    %c0_i32 = arith.constant 0 : i32
    %c0_i32_0 = arith.constant 0 : i32
    %c0_i32_1 = arith.constant 0 : i32
    return %c0_i32, %c0_i32_0 : i32, i32
  }
  func.func @transform_4(%arg0: i32) -> (i32, i32) {
    %c0_i32 = arith.constant 0 : i32
    %c0_i32_0 = arith.constant 0 : i32
    %c0_i32_1 = arith.constant 0 : i32
    return %c0_i32, %c0_i32_0 : i32, i32
  }
  func.func @transform_5(%arg0: i32) -> (i32, i32) {
    %c0_i32 = arith.constant 0 : i32
    %c0_i32_0 = arith.constant 0 : i32
    %c0_i32_1 = arith.constant 0 : i32
    return %c0_i32, %c0_i32_0 : i32, i32
  }
  func.func @transform_6(%arg0: i32) -> (i32, i32, i32) {
    %c0_i32 = arith.constant 0 : i32
    %c0_i32_0 = arith.constant 0 : i32
    %c0_i32_1 = arith.constant 0 : i32
    return %arg0, %c0_i32, %c0_i32_0 : i32, i32, i32
  }
}

</mosaic_0001>

<llo_original>
// kernel: tpu_custom_call.1
$region0: #{tpu_custom_call.1}
  #allocation0 [shape = 'u32[]', space=smem, size = 0x4, offset = 0x4, fixed_abs, tag = 'smem constant byte address 0x4 - core index']
  #allocation1 [shape = 'u32[144,128]{1,0:T(1,128)}', space=vmem, size = 0x12000, scoped, tag = 'internal scratch']
  %s0 = inlined_call_operand.vmem [shape: f32[2,8,32], index: 0, kind: input, shape index: {}]
  %s1 = inlined_call_operand.vmem [shape: bf16[32,256], index: 1, kind: input, shape index: {}]
  %s2 = inlined_call_operand.vmem [shape: bf16[32,256], index: 2, kind: input, shape index: {}]
  %s3 = inlined_call_operand.vmem [shape: bf16[32,256], index: 3, kind: input, shape index: {}]
  %s4 = inlined_call_operand.vmem [shape: bf16[256,32], index: 4, kind: input, shape index: {}]
  %s5 = inlined_call_operand.vmem [shape: f32[1,32], index: 5, kind: input, shape index: {}]
  %s6 = inlined_call_operand.hbm [shape: f32[2,8,32], index: 6, kind: output, shape index: {}]
  %s7 = sld [smem:[#allocation0]]
  $region57: #{tpu_custom_call.1} parent=0
    _
  %s9 = ssub.s32 1, %s7
  %s10 = scalar_select 0, %s9, %s7
  $region1: #{tpu_custom_call.1} parent=0
    #allocation2 [shape = 'u8[8192]{0}', space=vmem, size = 0x2000, scoped, tag = 'output window, operand 0']
    #allocation3 [shape = 's32[2]{0}', space=sflag, size = 0x8, scoped, tag = 'scoped memory for tpu_custom_call.1']
    %11 = vsyncpa [#allocation3], 0
    %s12 = scalar_lea.sflag [#allocation3], 1
    %13 = vsyncpa %s12, 0
    loop: start=0, step=1, limit=4
    $region2: #{tpu_custom_call.1} parent=1 // loop_pre_header
      _
    $region3: #{tpu_custom_call.1} parent=1 // loop_header
      %s15 = sphi 0, %s19
      %p16 = scmp.ge.s32.totalorder %s15, 4
      %s25 = sphi 0, %s27
      %s28 = sphi 0, %s25
      %s29 = sphi 0, %s28
      %s45 = sphi 0, %s29
      %s49 = sphi 0, %s49
      %s51 = sphi 0, %s49
      %s52 = sphi 0, %s51
      %s66 = sphi 0, %s52
      %s70 = sphi 0, %s70
      %s72 = sphi 0, %s70
      %s73 = sphi 0, %s72
      %s87 = sphi 0, %s73
      %s91 = sphi 0, %s91
      %s93 = sphi 0, %s91
      %s94 = sphi 0, %s93
      %s108 = sphi 0, %s94
      %s112 = sphi 0, %s112
      %s114 = sphi 0, %s112
      %s115 = sphi 0, %s114
      %s129 = sphi 0, %s115
      %s133 = sphi 0, %s133
      %s135 = sphi 0, %s133
      %s136 = sphi 0, %s135
      %s150 = sphi 0, %s136
      %s156 = sphi 0, %s158
      %s159 = sphi 0, %s156
      %s160 = sphi 0, %s159
      %s176 = sphi 0, %s160
    $region4: #{tpu_custom_call.1} parent=1 // loop_header_branch
      %18 = sbr.rel (%p16) target = $region8
    $region5: #{tpu_custom_call.1} parent=1 // loop_body
      %s20 = ssub.s32 %s15, 1
      %s21 = ssub.s32 %s15, 2
      %s22 = sadd.s32 %s15, 1
      %s23 = ssub.s32 %s15, %s22
      %p24 = scmp.eq.s32.totalorder %s23, 0
      %s26 = sadd.s32 %s25, 1
      %s27 = scalar_select %p24, %s25, %s26
      %p30 = pneg %p24
      %p31 = scmp.eq.s32.totalorder %s15, 1
      %p32 = por %p30, %p31
      %p33 = scmp.ne.s32.totalorder %s25, %s28
      %p34 = scmp.eq.s32.totalorder %s15, 0
      %p35 = por %p33, %p34
      %p36 = scmp.ne.s32.totalorder %s25, %s28
      %p37 = scmp.eq.s32.totalorder %s20, 1
      %p38 = por %p36, %p37
      %p39 = scmp.ne.s32.totalorder %s28, %s29
      %p40 = scmp.eq.s32.totalorder %s20, 0
      %p41 = por %p39, %p40
      %p42 = scmp.ne.s32.totalorder %s28, %s29
      %p43 = scmp.eq.s32.totalorder %s21, 1
      %p44 = por %p42, %p43
      %p46 = scmp.ne.s32.totalorder %s29, %s45
      %p47 = scmp.eq.s32.totalorder %s21, 0
      %p48 = por %p46, %p47
      %s50 = sadd.s32 %s49, 1
      %p53 = scmp.eq.s32.totalorder %s15, 1
      %p54 = scmp.ne.s32.totalorder %s49, %s51
      %p55 = scmp.eq.s32.totalorder %s15, 0
      %p56 = por %p54, %p55
      %p57 = scmp.ne.s32.totalorder %s49, %s51
      %p58 = scmp.eq.s32.totalorder %s20, 1
      %p59 = por %p57, %p58
      %p60 = scmp.ne.s32.totalorder %s51, %s52
      %p61 = scmp.eq.s32.totalorder %s20, 0
      %p62 = por %p60, %p61
      %p63 = scmp.ne.s32.totalorder %s51, %s52
      %p64 = scmp.eq.s32.totalorder %s21, 1
      %p65 = por %p63, %p64
      %p67 = scmp.ne.s32.totalorder %s52, %s66
      %p68 = scmp.eq.s32.totalorder %s21, 0
      %p69 = por %p67, %p68
      %s71 = sadd.s32 %s70, 1
      %p74 = scmp.eq.s32.totalorder %s15, 1
      %p75 = scmp.ne.s32.totalorder %s70, %s72
      %p76 = scmp.eq.s32.totalorder %s15, 0
      %p77 = por %p75, %p76
      %p78 = scmp.ne.s32.totalorder %s70, %s72
      %p79 = scmp.eq.s32.totalorder %s20, 1
      %p80 = por %p78, %p79
      %p81 = scmp.ne.s32.totalorder %s72, %s73
      %p82 = scmp.eq.s32.totalorder %s20, 0
      %p83 = por %p81, %p82
      %p84 = scmp.ne.s32.totalorder %s72, %s73
      %p85 = scmp.eq.s32.totalorder %s21, 1
      %p86 = por %p84, %p85
      %p88 = scmp.ne.s32.totalorder %s73, %s87
      %p89 = scmp.eq.s32.totalorder %s21, 0
      %p90 = por %p88, %p89
      %s92 = sadd.s32 %s91, 1
      %p95 = scmp.eq.s32.totalorder %s15, 1
      %p96 = scmp.ne.s32.totalorder %s91, %s93
      %p97 = scmp.eq.s32.totalorder %s15, 0
      %p98 = por %p96, %p97
      %p99 = scmp.ne.s32.totalorder %s91, %s93
      %p100 = scmp.eq.s32.totalorder %s20, 1
      %p101 = por %p99, %p100
      %p102 = scmp.ne.s32.totalorder %s93, %s94
      %p103 = scmp.eq.s32.totalorder %s20, 0
      %p104 = por %p102, %p103
      %p105 = scmp.ne.s32.totalorder %s93, %s94
      %p106 = scmp.eq.s32.totalorder %s21, 1
      %p107 = por %p105, %p106
      %p109 = scmp.ne.s32.totalorder %s94, %s108
      %p110 = scmp.eq.s32.totalorder %s21, 0
      %p111 = por %p109, %p110
      %s113 = sadd.s32 %s112, 1
      %p116 = scmp.eq.s32.totalorder %s15, 1
      %p117 = scmp.ne.s32.totalorder %s112, %s114
      %p118 = scmp.eq.s32.totalorder %s15, 0
      %p119 = por %p117, %p118
      %p120 = scmp.ne.s32.totalorder %s112, %s114
      %p121 = scmp.eq.s32.totalorder %s20, 1
      %p122 = por %p120, %p121
      %p123 = scmp.ne.s32.totalorder %s114, %s115
      %p124 = scmp.eq.s32.totalorder %s20, 0
      %p125 = por %p123, %p124
      %p126 = scmp.ne.s32.totalorder %s114, %s115
      %p127 = scmp.eq.s32.totalorder %s21, 1
      %p128 = por %p126, %p127
      %p130 = scmp.ne.s32.totalorder %s115, %s129
      %p131 = scmp.eq.s32.totalorder %s21, 0
      %p132 = por %p130, %p131
      %s134 = sadd.s32 %s133, 1
      %p137 = scmp.eq.s32.totalorder %s15, 1
      %p138 = scmp.ne.s32.totalorder %s133, %s135
      %p139 = scmp.eq.s32.totalorder %s15, 0
      %p140 = por %p138, %p139
      %p141 = scmp.ne.s32.totalorder %s133, %s135
      %p142 = scmp.eq.s32.totalorder %s20, 1
      %p143 = por %p141, %p142
      %p144 = scmp.ne.s32.totalorder %s135, %s136
      %p145 = scmp.eq.s32.totalorder %s20, 0
      %p146 = por %p144, %p145
      %p147 = scmp.ne.s32.totalorder %s135, %s136
      %p148 = scmp.eq.s32.totalorder %s21, 1
      %p149 = por %p147, %p148
      %p151 = scmp.ne.s32.totalorder %s136, %s150
      %p152 = scmp.eq.s32.totalorder %s21, 0
      %p153 = por %p151, %p152
      %s154 = ssub.s32 %s15, %s22
      %p155 = scmp.eq.s32.totalorder %s154, 0
      %s157 = sadd.s32 %s156, 1
      %s158 = scalar_select %p155, %s156, %s157
      %p161 = pneg %p155
      %p162 = scmp.eq.s32.totalorder %s15, 1
      %p163 = por %p161, %p162
      %p164 = scmp.ne.s32.totalorder %s156, %s159
      %p165 = scmp.eq.s32.totalorder %s15, 0
      %p166 = por %p164, %p165
      %p167 = scmp.ne.s32.totalorder %s156, %s159
      %p168 = scmp.eq.s32.totalorder %s20, 1
      %p169 = por %p167, %p168
      %p170 = scmp.ne.s32.totalorder %s159, %s160
      %p171 = scmp.eq.s32.totalorder %s20, 0
      %p172 = por %p170, %p171
      %p173 = scmp.ne.s32.totalorder %s159, %s160
      %p174 = scmp.eq.s32.totalorder %s21, 1
      %p175 = por %p173, %p174
      %p177 = scmp.ne.s32.totalorder %s160, %s176
      %p178 = scmp.eq.s32.totalorder %s21, 0
      %p179 = por %p177, %p178
      %p180 = scmp.le.s32.totalorder 1, %s15
      %p181 = scmp.lt.s32.totalorder %s15, 3
      %p182 = pnand %p180, %p181
      %p183 = pneg %p182
      // Predicated region
      $region9: #{tpu_custom_call.1} parent=5 // pred_check
        _
      $region10: #{tpu_custom_call.1} parent=5 // pred_check_branch
        %185 = sbr.rel (%p182) target = $region12
      $region11: #{tpu_custom_call.1} parent=5 // pred_region
        %s186 = ssub.s32 %s15, 1
        // Predicated region
        $region13: #{tpu_custom_call.1} parent=11 // pred_check
          %p187 = pneg %p62
        $region14: #{tpu_custom_call.1} parent=11 // pred_check_branch
          %189 = sbr.rel (%p187) target = $region16
        $region15: #{tpu_custom_call.1} parent=11 // pred_region
          _
        $region16: #{tpu_custom_call.1} parent=11 // pred_fallthru
          _
        // Predicated region
        $region17: #{tpu_custom_call.1} parent=11 // pred_check
          %p190 = pneg %p83
        $region18: #{tpu_custom_call.1} parent=11 // pred_check_branch
          %192 = sbr.rel (%p190) target = $region20
        $region19: #{tpu_custom_call.1} parent=11 // pred_region
          _
        $region20: #{tpu_custom_call.1} parent=11 // pred_fallthru
          _
        // Predicated region
        $region21: #{tpu_custom_call.1} parent=11 // pred_check
          %p193 = pneg %p104
        $region22: #{tpu_custom_call.1} parent=11 // pred_check_branch
          %195 = sbr.rel (%p193) target = $region24
        $region23: #{tpu_custom_call.1} parent=11 // pred_region
          _
        $region24: #{tpu_custom_call.1} parent=11 // pred_fallthru
          _
        // Predicated region
        $region25: #{tpu_custom_call.1} parent=11 // pred_check
          %p196 = pneg %p125
        $region26: #{tpu_custom_call.1} parent=11 // pred_check_branch
          %198 = sbr.rel (%p196) target = $region28
        $region27: #{tpu_custom_call.1} parent=11 // pred_region
          _
        $region28: #{tpu_custom_call.1} parent=11 // pred_fallthru
          _
        // Predicated region
        $region29: #{tpu_custom_call.1} parent=11 // pred_check
          %p199 = pneg %p146
        $region30: #{tpu_custom_call.1} parent=11 // pred_check_branch
          %201 = sbr.rel (%p199) target = $region32
        $region31: #{tpu_custom_call.1} parent=11 // pred_region
          _
        $region32: #{tpu_custom_call.1} parent=11 // pred_fallthru
          _
      $region12: #{tpu_custom_call.1} parent=5 // pred_fallthru
        _
      %p202 = scmp.lt.s32.totalorder %s15, 2
      // Predicated region
      $region33: #{tpu_custom_call.1} parent=5 // pred_check
        %p203 = pneg %p202
      $region34: #{tpu_custom_call.1} parent=5 // pred_check_branch
        %205 = sbr.rel (%p203) target = $region36
      $region35: #{tpu_custom_call.1} parent=5 // pred_region
        // Predicated region
        $region37: #{tpu_custom_call.1} parent=35 // pred_check
          %p206 = pneg %p35
        $region38: #{tpu_custom_call.1} parent=35 // pred_check_branch
          %208 = sbr.rel (%p206) target = $region40
        $region39: #{tpu_custom_call.1} parent=35 // pred_region
          %p209 = scmp.lt.s32.totalorder %s15, 1
          %s210 = scalar_select %p209, %s15, 1
          %s211 = smul.addr %s210, 8
          %s212 = scalar_lea.vmem %s0, %s211
        $region40: #{tpu_custom_call.1} parent=35 // pred_fallthru
          _
      $region36: #{tpu_custom_call.1} parent=5 // pred_fallthru
        _
      %p213 = scmp.le.s32.totalorder 1, %s15
      %p214 = scmp.lt.s32.totalorder %s15, 3
      %p215 = pnand %p213, %p214
      %p216 = pneg %p215
      // Predicated region
      $region41: #{tpu_custom_call.1} parent=5 // pred_check
        _
      $region42: #{tpu_custom_call.1} parent=5 // pred_check_branch
        %218 = sbr.rel (%p215) target = $region44
      $region43: #{tpu_custom_call.1} parent=5 // pred_region
        %s219 = ssub.s32 %s15, 1
        %p220 = scmp.lt.s32.totalorder %s20, 1
        %s221 = scalar_select %p220, %s20, 1
        %s222 = smul.addr %s221, 8
        %s223 = scalar_lea.vmem %s0, %s222
        %p224 = pneg %p41
        %p225 = pneg %p38
        %p226 = pneg %p62
        %p227 = pneg %p59
        %p228 = pneg %p83
        %p229 = pneg %p80
        %p230 = pneg %p104
        %p231 = pneg %p101
        %p232 = pneg %p125
        %p233 = pneg %p122
        %p234 = pneg %p146
        %p235 = pneg %p143
        %p236 = pneg %p172
        %p237 = pneg %p169
        %s238 = sand.u32 %s159, 1
        %s239 = scalar_lea.sflag [#allocation3], %s238
        %s240 = sand.u32 %s159, 1
        %s241 = smul.addr %s240, 8
        %s242 = scalar_lea.vmem [#allocation2], %s241
        %p243 = scmp.lt.s32.totalorder %s20, 1
        %s244 = scalar_select %p243, %s20, 1
        %s245 = smul.addr %s244, 8
        %s246 = scalar_lea.vmem %s0, %s245
        %v248 = vld [vmem:[%s246] sm:$0xff]
        %v249 = vpack.c.bf16 %v248, %v248
        %v250 = vld [vmem:[%s1] sm:$0xff]
        %v251 = vld [vmem:[%s1 + $0x8] sm:$0xff]
        %v252 = vld [vmem:[%s1 + $0x10] sm:$0xff]
        %v253 = vld [vmem:[%s1 + $0x18] sm:$0xff]
        %v258 = vunpack.c.l.b16 %v250
        %v259 = vunpack.c.h.b16 %v250
        %v260 = vunpack.c.l.b16 %v251
        %v261 = vunpack.c.h.b16 %v251
        %v262 = vunpack.c.l.b16 %v252
        %v263 = vunpack.c.h.b16 %v252
        %v264 = vunpack.c.l.b16 %v253
        %v265 = vunpack.c.h.b16 %v253
        %v266 = vpack.c.b16 %v260, %v258
        %v267 = vpack.c.b16 %v261, %v259
        %v268 = vpack.c.b16 %v264, %v262
        %v269 = vpack.c.b16 %v265, %v263
        %vm274 = vcmask 261120
        %v276 = vsel %vm274, %v249, 0
        %278 = vmatprep.subr.bf16.mxu0 0
        %279 = vmatpush1.bf16.msra.mxu0 0
        %280 = vmatprep.subr.bf16.mxu0 0
        %281 = vmatpush1.bf16.msra.mxu0 0
        %282 = vmatprep.subr.bf16.mxu0 0
        %283 = vmatpush1.bf16.msra.mxu0 0
        %284 = vmatprep.subr.bf16.mxu0 0
        %285 = vmatpush1.bf16.msra.mxu0 0
        %286 = vmatprep.subr.bf16.mxu0 0
        %287 = vmatpush1.bf16.msra.mxu0 0
        %288 = vmatprep.subr.bf16.mxu0 0
        %289 = vmatpush1.bf16.msra.mxu0 0
        %290 = vmatprep.subr.bf16.mxu0 %v269
        %291 = vmatpush1.bf16.msra.mxu0 %v268
        %292 = vmatprep.subr.bf16.mxu0 %v267
        %293 = vmatpush1.bf16.msra.mxu0 %v266
        %294 = vmatprep.subr.bf16.mxu0 0
        %295 = vmatpush2.bf16.msra.mxu0 0
        %296 = vmatprep.subr.bf16.mxu0 0
        %297 = vmatpush2.bf16.msra.mxu0 0
        %298 = vmatprep.subr.bf16.mxu0 0
        %299 = vmatpush2.bf16.msra.mxu0 0
        %300 = vmatprep.subr.bf16.mxu0 0
        %301 = vmatpush2.bf16.msra.mxu0 0
        %302 = vmatprep.subr.bf16.mxu0 0
        %303 = vmatpush2.bf16.msra.mxu0 0
        %304 = vmatprep.subr.bf16.mxu0 0
        %305 = vmatpush2.bf16.msra.mxu0 0
        %306 = vmatprep.subr.bf16.mxu0 0
        %307 = vmatpush2.bf16.msra.mxu0 0
        %308 = vmatprep.subr.bf16.mxu0 0
        %309 = vmatpush2.bf16.msra.mxu0 0
        %310 = vmatprep.mubr.bf16.mxu0 0
        %311 = vmatmul.mubr.bf16.gmra.mxu0 %v276
        %v312 = vpop.f32.mrf.mxu0
        %v313 = vadd.f32 0.0, %v312
        %v314 = vpop.f32.mrf.mxu0
        %v315 = vadd.f32 0.0, %v314
        %v316 = vpop.f32.mrf.mxu0
        %v317 = vpop.f32.mrf.mxu0
        %318 = vdwg.mxu0
        %v319 = vld [vmem:[%s2] sm:$0xff]
        %v320 = vld [vmem:[%s2 + $0x8] sm:$0xff]
        %v321 = vld [vmem:[%s2 + $0x10] sm:$0xff]
        %v322 = vld [vmem:[%s2 + $0x18] sm:$0xff]
        %v327 = vunpack.c.l.b16 %v319
        %v328 = vunpack.c.h.b16 %v319
        %v329 = vunpack.c.l.b16 %v320
        %v330 = vunpack.c.h.b16 %v320
        %v331 = vunpack.c.l.b16 %v321
        %v332 = vunpack.c.h.b16 %v321
        %v333 = vunpack.c.l.b16 %v322
        %v334 = vunpack.c.h.b16 %v322
        %v335 = vpack.c.b16 %v329, %v327
        %v336 = vpack.c.b16 %v330, %v328
        %v337 = vpack.c.b16 %v333, %v331
        %v338 = vpack.c.b16 %v334, %v332
        %343 = vmatprep.subr.bf16.mxu0 0
        %344 = vmatpush1.bf16.msra.mxu0 0
        %345 = vmatprep.subr.bf16.mxu0 0
        %346 = vmatpush1.bf16.msra.mxu0 0
        %347 = vmatprep.subr.bf16.mxu0 0
        %348 = vmatpush1.bf16.msra.mxu0 0
        %349 = vmatprep.subr.bf16.mxu0 0
        %350 = vmatpush1.bf16.msra.mxu0 0
        %351 = vmatprep.subr.bf16.mxu0 0
        %352 = vmatpush1.bf16.msra.mxu0 0
        %353 = vmatprep.subr.bf16.mxu0 0
        %354 = vmatpush1.bf16.msra.mxu0 0
        %355 = vmatprep.subr.bf16.mxu0 %v338
        %356 = vmatpush1.bf16.msra.mxu0 %v337
        %357 = vmatprep.subr.bf16.mxu0 %v336
        %358 = vmatpush1.bf16.msra.mxu0 %v335
        %359 = vmatprep.subr.bf16.mxu0 0
        %360 = vmatpush2.bf16.msra.mxu0 0
        %361 = vmatprep.subr.bf16.mxu0 0
        %362 = vmatpush2.bf16.msra.mxu0 0
        %363 = vmatprep.subr.bf16.mxu0 0
        %364 = vmatpush2.bf16.msra.mxu0 0
        %365 = vmatprep.subr.bf16.mxu0 0
        %366 = vmatpush2.bf16.msra.mxu0 0
        %367 = vmatprep.subr.bf16.mxu0 0
        %368 = vmatpush2.bf16.msra.mxu0 0
        %369 = vmatprep.subr.bf16.mxu0 0
        %370 = vmatpush2.bf16.msra.mxu0 0
        %371 = vmatprep.subr.bf16.mxu0 0
        %372 = vmatpush2.bf16.msra.mxu0 0
        %373 = vmatprep.subr.bf16.mxu0 0
        %374 = vmatpush2.bf16.msra.mxu0 0
        %375 = vmatprep.mubr.bf16.mxu0 0
        %376 = vmatmul.mubr.bf16.gmra.mxu0 %v276
        %v377 = vpop.f32.mrf.mxu0
        %v378 = vadd.f32 0.0, %v377
        %v379 = vpop.f32.mrf.mxu0
        %v380 = vadd.f32 0.0, %v379
        %v381 = vpop.f32.mrf.mxu0
        %v382 = vpop.f32.mrf.mxu0
        %383 = vdwg.mxu0
        %v384 = vld [vmem:[%s3] sm:$0xff]
        %v385 = vld [vmem:[%s3 + $0x8] sm:$0xff]
        %v386 = vld [vmem:[%s3 + $0x10] sm:$0xff]
        %v387 = vld [vmem:[%s3 + $0x18] sm:$0xff]
        %v392 = vunpack.c.l.b16 %v384
        %v393 = vunpack.c.h.b16 %v384
        %v394 = vunpack.c.l.b16 %v385
        %v395 = vunpack.c.h.b16 %v385
        %v396 = vunpack.c.l.b16 %v386
        %v397 = vunpack.c.h.b16 %v386
        %v398 = vunpack.c.l.b16 %v387
        %v399 = vunpack.c.h.b16 %v387
        %v400 = vpack.c.b16 %v394, %v392
        %v401 = vpack.c.b16 %v395, %v393
        %v402 = vpack.c.b16 %v398, %v396
        %v403 = vpack.c.b16 %v399, %v397
        %408 = vmatprep.subr.bf16.mxu0 0
        %409 = vmatpush1.bf16.msra.mxu0 0
        %410 = vmatprep.subr.bf16.mxu0 0
        %411 = vmatpush1.bf16.msra.mxu0 0
        %412 = vmatprep.subr.bf16.mxu0 0
        %413 = vmatpush1.bf16.msra.mxu0 0
        %414 = vmatprep.subr.bf16.mxu0 0
        %415 = vmatpush1.bf16.msra.mxu0 0
        %416 = vmatprep.subr.bf16.mxu0 0
        %417 = vmatpush1.bf16.msra.mxu0 0
        %418 = vmatprep.subr.bf16.mxu0 0
        %419 = vmatpush1.bf16.msra.mxu0 0
        %420 = vmatprep.subr.bf16.mxu0 %v403
        %421 = vmatpush1.bf16.msra.mxu0 %v402
        %422 = vmatprep.subr.bf16.mxu0 %v401
        %423 = vmatpush1.bf16.msra.mxu0 %v400
        %424 = vmatprep.subr.bf16.mxu0 0
        %425 = vmatpush2.bf16.msra.mxu0 0
        %426 = vmatprep.subr.bf16.mxu0 0
        %427 = vmatpush2.bf16.msra.mxu0 0
        %428 = vmatprep.subr.bf16.mxu0 0
        %429 = vmatpush2.bf16.msra.mxu0 0
        %430 = vmatprep.subr.bf16.mxu0 0
        %431 = vmatpush2.bf16.msra.mxu0 0
        %432 = vmatprep.subr.bf16.mxu0 0
        %433 = vmatpush2.bf16.msra.mxu0 0
        %434 = vmatprep.subr.bf16.mxu0 0
        %435 = vmatpush2.bf16.msra.mxu0 0
        %436 = vmatprep.subr.bf16.mxu0 0
        %437 = vmatpush2.bf16.msra.mxu0 0
        %438 = vmatprep.subr.bf16.mxu0 0
        %439 = vmatpush2.bf16.msra.mxu0 0
        %440 = vmatprep.mubr.bf16.mxu0 0
        %441 = vmatmul.mubr.bf16.gmra.mxu0 %v276
        %v442 = vpop.f32.mrf.mxu0
        %v443 = vadd.f32 0.0, %v442
        %v444 = vpop.f32.mrf.mxu0
        %v445 = vadd.f32 0.0, %v444
        %v446 = vpop.f32.mrf.mxu0
        %v447 = vpop.f32.mrf.mxu0
        %448 = vdwg.mxu0
        %v449 = vpack.c.bf16 %v313, %v313
        %v450 = vpack.c.bf16 %v378, %v378
        %v451 = vpack.c.bf16 %v443, %v443
        %v453 = vsel %vm274, %v449, 0
        %v456 = vsel %vm274, %v450, 0
        %458 = vmatprep.subr.bf16.mxu0 0
        %459 = vmatpush1.bf16.xpose.msra.mxu0 0
        %460 = vmatprep.subr.bf16.mxu0 0
        %461 = vmatpush1.bf16.xpose.msra.mxu0 0
        %462 = vmatprep.subr.bf16.mxu0 0
        %463 = vmatpush1.bf16.xpose.msra.mxu0 0
        %464 = vmatprep.subr.bf16.mxu0 0
        %465 = vmatpush1.bf16.xpose.msra.mxu0 0
        %466 = vmatprep.subr.bf16.mxu0 0
        %467 = vmatpush1.bf16.xpose.msra.mxu0 0
        %468 = vmatprep.subr.bf16.mxu0 0
        %469 = vmatpush1.bf16.xpose.msra.mxu0 0
        %470 = vmatprep.subr.bf16.mxu0 0
        %471 = vmatpush1.bf16.xpose.msra.mxu0 0
        %472 = vmatprep.subr.bf16.mxu0 0
        %473 = vmatpush1.bf16.xpose.msra.mxu0 %v456
        %474 = vmatprep.subr.bf16.mxu0 0
        %475 = vmatpush2.bf16.xpose.msra.mxu0 0
        %476 = vmatprep.subr.bf16.mxu0 0
        %477 = vmatpush2.bf16.xpose.msra.mxu0 0
        %478 = vmatprep.subr.bf16.mxu0 0
        %479 = vmatpush2.bf16.xpose.msra.mxu0 0
        %480 = vmatprep.subr.bf16.mxu0 0
        %481 = vmatpush2.bf16.xpose.msra.mxu0 0
        %482 = vmatprep.subr.bf16.mxu0 0
        %483 = vmatpush2.bf16.xpose.msra.mxu0 0
        %484 = vmatprep.subr.bf16.mxu0 0
        %485 = vmatpush2.bf16.xpose.msra.mxu0 0
        %486 = vmatprep.subr.bf16.mxu0 0
        %487 = vmatpush2.bf16.xpose.msra.mxu0 0
        %488 = vmatprep.subr.bf16.mxu0 0
        %489 = vmatpush2.bf16.xpose.msra.mxu0 0
        %490 = vmatprep.mubr.bf16.mxu0 0
        %491 = vmatmul.mubr.bf16.gmra.mxu0 %v453
        %v492 = vpop.f32.mrf.mxu0
        %v493 = vadd.f32 0.0, %v492
        %v494 = vpop.f32.mrf.mxu0
        %v495 = vpop.f32.mrf.mxu0
        %v496 = vpop.f32.mrf.mxu0
        %497 = vdwg.mxu0
        %vm498 = vcmask 64512
        %v499 = vsel %vm498, %v493, -inf
        %500 = vmax.xlane.f32.xlu0 %v499
        %v501 = vpop.xlane.xlu0 %500
        %v502 = vsub.f32 %v493, %v501
        %v503 = vmul.f32 %v502, 1.442695
        %v504 = vpow.pop %v503
        %v505 = vsel %vm498, %v504, 0.0
        %506 = vadd.xlane.f32.xlu0 %v505
        %v507 = vpop.xlane.xlu0 %506
        %v508 = vrcp.pop %v507
        %v509 = vpack.c.bf16 %v504, %v504
        %v511 = vsel %vm498, %v509, 0
        %vm513 = vcmask 1043456
        %v515 = vsel %vm513, %v451, 0
        %517 = vmatprep.subr.bf16.mxu0 0
        %518 = vmatpush1.bf16.msra.mxu0 0
        %519 = vmatprep.subr.bf16.mxu0 0
        %520 = vmatpush1.bf16.msra.mxu0 0
        %521 = vmatprep.subr.bf16.mxu0 0
        %522 = vmatpush1.bf16.msra.mxu0 0
        %523 = vmatprep.subr.bf16.mxu0 0
        %524 = vmatpush1.bf16.msra.mxu0 0
        %525 = vmatprep.subr.bf16.mxu0 0
        %526 = vmatpush1.bf16.msra.mxu0 0
        %527 = vmatprep.subr.bf16.mxu0 0
        %528 = vmatpush1.bf16.msra.mxu0 0
        %529 = vmatprep.subr.bf16.mxu0 0
        %530 = vmatpush1.bf16.msra.mxu0 0
        %531 = vmatprep.subr.bf16.mxu0 0
        %532 = vmatpush1.bf16.msra.mxu0 %v515
        %533 = vmatprep.subr.bf16.mxu0 0
        %534 = vmatpush2.bf16.msra.mxu0 0
        %535 = vmatprep.subr.bf16.mxu0 0
        %536 = vmatpush2.bf16.msra.mxu0 0
        %537 = vmatprep.subr.bf16.mxu0 0
        %538 = vmatpush2.bf16.msra.mxu0 0
        %539 = vmatprep.subr.bf16.mxu0 0
        %540 = vmatpush2.bf16.msra.mxu0 0
        %541 = vmatprep.subr.bf16.mxu0 0
        %542 = vmatpush2.bf16.msra.mxu0 0
        %543 = vmatprep.subr.bf16.mxu0 0
        %544 = vmatpush2.bf16.msra.mxu0 0
        %545 = vmatprep.subr.bf16.mxu0 0
        %546 = vmatpush2.bf16.msra.mxu0 0
        %547 = vmatprep.subr.bf16.mxu0 0
        %548 = vmatpush2.bf16.msra.mxu0 0
        %549 = vmatprep.mubr.bf16.mxu0 0
        %550 = vmatmul.mubr.bf16.gmra.mxu0 %v511
        %v551 = vpop.f32.mrf.mxu0
        %v552 = vadd.f32 0.0, %v551
        %v553 = vpop.f32.mrf.mxu0
        %v554 = vpop.f32.mrf.mxu0
        %v555 = vpop.f32.mrf.mxu0
        %556 = vdwg.mxu0
        %v557 = vmul.f32 %v552, %v508
        %559 = vrot.lane.b32.xlu0 %v449, 96
        %v560 = vpop.permute.xlu0 %559
        %562 = vrot.lane.b32.xlu0 %v450, 96
        %v563 = vpop.permute.xlu0 %562
        %v565 = vsel %vm274, %v560, 0
        %v568 = vsel %vm274, %v563, 0
        %570 = vmatprep.subr.bf16.mxu0 0
        %571 = vmatpush1.bf16.xpose.msra.mxu0 0
        %572 = vmatprep.subr.bf16.mxu0 0
        %573 = vmatpush1.bf16.xpose.msra.mxu0 0
        %574 = vmatprep.subr.bf16.mxu0 0
        %575 = vmatpush1.bf16.xpose.msra.mxu0 0
        %576 = vmatprep.subr.bf16.mxu0 0
        %577 = vmatpush1.bf16.xpose.msra.mxu0 0
        %578 = vmatprep.subr.bf16.mxu0 0
        %579 = vmatpush1.bf16.xpose.msra.mxu0 0
        %580 = vmatprep.subr.bf16.mxu0 0
        %581 = vmatpush1.bf16.xpose.msra.mxu0 0
        %582 = vmatprep.subr.bf16.mxu0 0
        %583 = vmatpush1.bf16.xpose.msra.mxu0 0
        %584 = vmatprep.subr.bf16.mxu0 0
        %585 = vmatpush1.bf16.xpose.msra.mxu0 %v568
        %586 = vmatprep.subr.bf16.mxu0 0
        %587 = vmatpush2.bf16.xpose.msra.mxu0 0
        %588 = vmatprep.subr.bf16.mxu0 0
        %589 = vmatpush2.bf16.xpose.msra.mxu0 0
        %590 = vmatprep.subr.bf16.mxu0 0
        %591 = vmatpush2.bf16.xpose.msra.mxu0 0
        %592 = vmatprep.subr.bf16.mxu0 0
        %593 = vmatpush2.bf16.xpose.msra.mxu0 0
        %594 = vmatprep.subr.bf16.mxu0 0
        %595 = vmatpush2.bf16.xpose.msra.mxu0 0
        %596 = vmatprep.subr.bf16.mxu0 0
        %597 = vmatpush2.bf16.xpose.msra.mxu0 0
        %598 = vmatprep.subr.bf16.mxu0 0
        %599 = vmatpush2.bf16.xpose.msra.mxu0 0
        %600 = vmatprep.subr.bf16.mxu0 0
        %601 = vmatpush2.bf16.xpose.msra.mxu0 0
        %602 = vmatprep.mubr.bf16.mxu0 0
        %603 = vmatmul.mubr.bf16.gmra.mxu0 %v565
        %v604 = vpop.f32.mrf.mxu0
        %v605 = vadd.f32 0.0, %v604
        %v606 = vpop.f32.mrf.mxu0
        %v607 = vpop.f32.mrf.mxu0
        %v608 = vpop.f32.mrf.mxu0
        %609 = vdwg.mxu0
        %v610 = vsel %vm498, %v605, -inf
        %611 = vmax.xlane.f32.xlu0 %v610
        %v612 = vpop.xlane.xlu0 %611
        %v613 = vsub.f32 %v605, %v612
        %v614 = vmul.f32 %v613, 1.442695
        %v615 = vpow.pop %v614
        %v616 = vsel %vm498, %v615, 0.0
        %617 = vadd.xlane.f32.xlu0 %v616
        %v618 = vpop.xlane.xlu0 %617
        %v619 = vrcp.pop %v618
        %v620 = vpack.c.bf16 %v615, %v615
        %622 = vrot.lane.b32.xlu0 %v451, 96
        %v623 = vpop.permute.xlu0 %622
        %v625 = vsel %vm498, %v620, 0
        %v628 = vsel %vm513, %v623, 0
        %630 = vmatprep.subr.bf16.mxu0 0
        %631 = vmatpush1.bf16.msra.mxu0 0
        %632 = vmatprep.subr.bf16.mxu0 0
        %633 = vmatpush1.bf16.msra.mxu0 0
        %634 = vmatprep.subr.bf16.mxu0 0
        %635 = vmatpush1.bf16.msra.mxu0 0
        %636 = vmatprep.subr.bf16.mxu0 0
        %637 = vmatpush1.bf16.msra.mxu0 0
        %638 = vmatprep.subr.bf16.mxu0 0
        %639 = vmatpush1.bf16.msra.mxu0 0
        %640 = vmatprep.subr.bf16.mxu0 0
        %641 = vmatpush1.bf16.msra.mxu0 0
        %642 = vmatprep.subr.bf16.mxu0 0
        %643 = vmatpush1.bf16.msra.mxu0 0
        %644 = vmatprep.subr.bf16.mxu0 0
        %645 = vmatpush1.bf16.msra.mxu0 %v628
        %646 = vmatprep.subr.bf16.mxu0 0
        %647 = vmatpush2.bf16.msra.mxu0 0
        %648 = vmatprep.subr.bf16.mxu0 0
        %649 = vmatpush2.bf16.msra.mxu0 0
        %650 = vmatprep.subr.bf16.mxu0 0
        %651 = vmatpush2.bf16.msra.mxu0 0
        %652 = vmatprep.subr.bf16.mxu0 0
        %653 = vmatpush2.bf16.msra.mxu0 0
        %654 = vmatprep.subr.bf16.mxu0 0
        %655 = vmatpush2.bf16.msra.mxu0 0
        %656 = vmatprep.subr.bf16.mxu0 0
        %657 = vmatpush2.bf16.msra.mxu0 0
        %658 = vmatprep.subr.bf16.mxu0 0
        %659 = vmatpush2.bf16.msra.mxu0 0
        %660 = vmatprep.subr.bf16.mxu0 0
        %661 = vmatpush2.bf16.msra.mxu0 0
        %662 = vmatprep.mubr.bf16.mxu0 0
        %663 = vmatmul.mubr.bf16.gmra.mxu0 %v625
        %v664 = vpop.f32.mrf.mxu0
        %v665 = vadd.f32 0.0, %v664
        %v666 = vpop.f32.mrf.mxu0
        %v667 = vpop.f32.mrf.mxu0
        %v668 = vpop.f32.mrf.mxu0
        %669 = vdwg.mxu0
        %v670 = vmul.f32 %v665, %v619
        %671 = vrot.lane.b32.xlu0 %v449, 64
        %v672 = vpop.permute.xlu0 %671
        %673 = vrot.lane.b32.xlu0 %v450, 64
        %v674 = vpop.permute.xlu0 %673
        %v676 = vsel %vm274, %v672, 0
        %v679 = vsel %vm274, %v674, 0
        %681 = vmatprep.subr.bf16.mxu0 0
        %682 = vmatpush1.bf16.xpose.msra.mxu0 0
        %683 = vmatprep.subr.bf16.mxu0 0
        %684 = vmatpush1.bf16.xpose.msra.mxu0 0
        %685 = vmatprep.subr.bf16.mxu0 0
        %686 = vmatpush1.bf16.xpose.msra.mxu0 0
        %687 = vmatprep.subr.bf16.mxu0 0
        %688 = vmatpush1.bf16.xpose.msra.mxu0 0
        %689 = vmatprep.subr.bf16.mxu0 0
        %690 = vmatpush1.bf16.xpose.msra.mxu0 0
        %691 = vmatprep.subr.bf16.mxu0 0
        %692 = vmatpush1.bf16.xpose.msra.mxu0 0
        %693 = vmatprep.subr.bf16.mxu0 0
        %694 = vmatpush1.bf16.xpose.msra.mxu0 0
        %695 = vmatprep.subr.bf16.mxu0 0
        %696 = vmatpush1.bf16.xpose.msra.mxu0 %v679
        %697 = vmatprep.subr.bf16.mxu0 0
        %698 = vmatpush2.bf16.xpose.msra.mxu0 0
        %699 = vmatprep.subr.bf16.mxu0 0
        %700 = vmatpush2.bf16.xpose.msra.mxu0 0
        %701 = vmatprep.subr.bf16.mxu0 0
        %702 = vmatpush2.bf16.xpose.msra.mxu0 0
        %703 = vmatprep.subr.bf16.mxu0 0
        %704 = vmatpush2.bf16.xpose.msra.mxu0 0
        %705 = vmatprep.subr.bf16.mxu0 0
        %706 = vmatpush2.bf16.xpose.msra.mxu0 0
        %707 = vmatprep.subr.bf16.mxu0 0
        %708 = vmatpush2.bf16.xpose.msra.mxu0 0
        %709 = vmatprep.subr.bf16.mxu0 0
        %710 = vmatpush2.bf16.xpose.msra.mxu0 0
        %711 = vmatprep.subr.bf16.mxu0 0
        %712 = vmatpush2.bf16.xpose.msra.mxu0 0
        %713 = vmatprep.mubr.bf16.mxu0 0
        %714 = vmatmul.mubr.bf16.gmra.mxu0 %v676
        %v715 = vpop.f32.mrf.mxu0
        %v716 = vadd.f32 0.0, %v715
        %v717 = vpop.f32.mrf.mxu0
        %v718 = vpop.f32.mrf.mxu0
        %v719 = vpop.f32.mrf.mxu0
        %720 = vdwg.mxu0
        %v721 = vsel %vm498, %v716, -inf
        %722 = vmax.xlane.f32.xlu0 %v721
        %v723 = vpop.xlane.xlu0 %722
        %v724 = vsub.f32 %v716, %v723
        %v725 = vmul.f32 %v724, 1.442695
        %v726 = vpow.pop %v725
        %v727 = vsel %vm498, %v726, 0.0
        %728 = vadd.xlane.f32.xlu0 %v727
        %v729 = vpop.xlane.xlu0 %728
        %v730 = vrcp.pop %v729
        %v731 = vpack.c.bf16 %v726, %v726
        %732 = vrot.lane.b32.xlu0 %v451, 64
        %v733 = vpop.permute.xlu0 %732
        %v735 = vsel %vm498, %v731, 0
        %v738 = vsel %vm513, %v733, 0
        %740 = vmatprep.subr.bf16.mxu0 0
        %741 = vmatpush1.bf16.msra.mxu0 0
        %742 = vmatprep.subr.bf16.mxu0 0
        %743 = vmatpush1.bf16.msra.mxu0 0
        %744 = vmatprep.subr.bf16.mxu0 0
        %745 = vmatpush1.bf16.msra.mxu0 0
        %746 = vmatprep.subr.bf16.mxu0 0
        %747 = vmatpush1.bf16.msra.mxu0 0
        %748 = vmatprep.subr.bf16.mxu0 0
        %749 = vmatpush1.bf16.msra.mxu0 0
        %750 = vmatprep.subr.bf16.mxu0 0
        %751 = vmatpush1.bf16.msra.mxu0 0
        %752 = vmatprep.subr.bf16.mxu0 0
        %753 = vmatpush1.bf16.msra.mxu0 0
        %754 = vmatprep.subr.bf16.mxu0 0
        %755 = vmatpush1.bf16.msra.mxu0 %v738
        %756 = vmatprep.subr.bf16.mxu0 0
        %757 = vmatpush2.bf16.msra.mxu0 0
        %758 = vmatprep.subr.bf16.mxu0 0
        %759 = vmatpush2.bf16.msra.mxu0 0
        %760 = vmatprep.subr.bf16.mxu0 0
        %761 = vmatpush2.bf16.msra.mxu0 0
        %762 = vmatprep.subr.bf16.mxu0 0
        %763 = vmatpush2.bf16.msra.mxu0 0
        %764 = vmatprep.subr.bf16.mxu0 0
        %765 = vmatpush2.bf16.msra.mxu0 0
        %766 = vmatprep.subr.bf16.mxu0 0
        %767 = vmatpush2.bf16.msra.mxu0 0
        %768 = vmatprep.subr.bf16.mxu0 0
        %769 = vmatpush2.bf16.msra.mxu0 0
        %770 = vmatprep.subr.bf16.mxu0 0
        %771 = vmatpush2.bf16.msra.mxu0 0
        %772 = vmatprep.mubr.bf16.mxu0 0
        %773 = vmatmul.mubr.bf16.gmra.mxu0 %v735
        %v774 = vpop.f32.mrf.mxu0
        %v775 = vadd.f32 0.0, %v774
        %v776 = vpop.f32.mrf.mxu0
        %v777 = vpop.f32.mrf.mxu0
        %v778 = vpop.f32.mrf.mxu0
        %779 = vdwg.mxu0
        %v780 = vmul.f32 %v775, %v730
        %781 = vrot.lane.b32.xlu0 %v449, 32
        %v782 = vpop.permute.xlu0 %781
        %783 = vrot.lane.b32.xlu0 %v450, 32
        %v784 = vpop.permute.xlu0 %783
        %v786 = vsel %vm274, %v782, 0
        %v789 = vsel %vm274, %v784, 0
        %791 = vmatprep.subr.bf16.mxu0 0
        %792 = vmatpush1.bf16.xpose.msra.mxu0 0
        %793 = vmatprep.subr.bf16.mxu0 0
        %794 = vmatpush1.bf16.xpose.msra.mxu0 0
        %795 = vmatprep.subr.bf16.mxu0 0
        %796 = vmatpush1.bf16.xpose.msra.mxu0 0
        %797 = vmatprep.subr.bf16.mxu0 0
        %798 = vmatpush1.bf16.xpose.msra.mxu0 0
        %799 = vmatprep.subr.bf16.mxu0 0
        %800 = vmatpush1.bf16.xpose.msra.mxu0 0
        %801 = vmatprep.subr.bf16.mxu0 0
        %802 = vmatpush1.bf16.xpose.msra.mxu0 0
        %803 = vmatprep.subr.bf16.mxu0 0
        %804 = vmatpush1.bf16.xpose.msra.mxu0 0
        %805 = vmatprep.subr.bf16.mxu0 0
        %806 = vmatpush1.bf16.xpose.msra.mxu0 %v789
        %807 = vmatprep.subr.bf16.mxu0 0
        %808 = vmatpush2.bf16.xpose.msra.mxu0 0
        %809 = vmatprep.subr.bf16.mxu0 0
        %810 = vmatpush2.bf16.xpose.msra.mxu0 0
        %811 = vmatprep.subr.bf16.mxu0 0
        %812 = vmatpush2.bf16.xpose.msra.mxu0 0
        %813 = vmatprep.subr.bf16.mxu0 0
        %814 = vmatpush2.bf16.xpose.msra.mxu0 0
        %815 = vmatprep.subr.bf16.mxu0 0
        %816 = vmatpush2.bf16.xpose.msra.mxu0 0
        %817 = vmatprep.subr.bf16.mxu0 0
        %818 = vmatpush2.bf16.xpose.msra.mxu0 0
        %819 = vmatprep.subr.bf16.mxu0 0
        %820 = vmatpush2.bf16.xpose.msra.mxu0 0
        %821 = vmatprep.subr.bf16.mxu0 0
        %822 = vmatpush2.bf16.xpose.msra.mxu0 0
        %823 = vmatprep.mubr.bf16.mxu0 0
        %824 = vmatmul.mubr.bf16.gmra.mxu0 %v786
        %v825 = vpop.f32.mrf.mxu0
        %v826 = vadd.f32 0.0, %v825
        %v827 = vpop.f32.mrf.mxu0
        %v828 = vpop.f32.mrf.mxu0
        %v829 = vpop.f32.mrf.mxu0
        %830 = vdwg.mxu0
        %v831 = vsel %vm498, %v826, -inf
        %832 = vmax.xlane.f32.xlu0 %v831
        %v833 = vpop.xlane.xlu0 %832
        %v834 = vsub.f32 %v826, %v833
        %v835 = vmul.f32 %v834, 1.442695
        %v836 = vpow.pop %v835
        %v837 = vsel %vm498, %v836, 0.0
        %838 = vadd.xlane.f32.xlu0 %v837
        %v839 = vpop.xlane.xlu0 %838
        %v840 = vrcp.pop %v839
        %v841 = vpack.c.bf16 %v836, %v836
        %842 = vrot.lane.b32.xlu0 %v451, 32
        %v843 = vpop.permute.xlu0 %842
        %v845 = vsel %vm498, %v841, 0
        %v848 = vsel %vm513, %v843, 0
        %850 = vmatprep.subr.bf16.mxu0 0
        %851 = vmatpush1.bf16.msra.mxu0 0
        %852 = vmatprep.subr.bf16.mxu0 0
        %853 = vmatpush1.bf16.msra.mxu0 0
        %854 = vmatprep.subr.bf16.mxu0 0
        %855 = vmatpush1.bf16.msra.mxu0 0
        %856 = vmatprep.subr.bf16.mxu0 0
        %857 = vmatpush1.bf16.msra.mxu0 0
        %858 = vmatprep.subr.bf16.mxu0 0
        %859 = vmatpush1.bf16.msra.mxu0 0
        %860 = vmatprep.subr.bf16.mxu0 0
        %861 = vmatpush1.bf16.msra.mxu0 0
        %862 = vmatprep.subr.bf16.mxu0 0
        %863 = vmatpush1.bf16.msra.mxu0 0
        %864 = vmatprep.subr.bf16.mxu0 0
        %865 = vmatpush1.bf16.msra.mxu0 %v848
        %866 = vmatprep.subr.bf16.mxu0 0
        %867 = vmatpush2.bf16.msra.mxu0 0
        %868 = vmatprep.subr.bf16.mxu0 0
        %869 = vmatpush2.bf16.msra.mxu0 0
        %870 = vmatprep.subr.bf16.mxu0 0
        %871 = vmatpush2.bf16.msra.mxu0 0
        %872 = vmatprep.subr.bf16.mxu0 0
        %873 = vmatpush2.bf16.msra.mxu0 0
        %874 = vmatprep.subr.bf16.mxu0 0
        %875 = vmatpush2.bf16.msra.mxu0 0
        %876 = vmatprep.subr.bf16.mxu0 0
        %877 = vmatpush2.bf16.msra.mxu0 0
        %878 = vmatprep.subr.bf16.mxu0 0
        %879 = vmatpush2.bf16.msra.mxu0 0
        %880 = vmatprep.subr.bf16.mxu0 0
        %881 = vmatpush2.bf16.msra.mxu0 0
        %882 = vmatprep.mubr.bf16.mxu0 0
        %883 = vmatmul.mubr.bf16.gmra.mxu0 %v845
        %v884 = vpop.f32.mrf.mxu0
        %v885 = vadd.f32 0.0, %v884
        %v886 = vpop.f32.mrf.mxu0
        %v887 = vpop.f32.mrf.mxu0
        %v888 = vpop.f32.mrf.mxu0
        %889 = vdwg.mxu0
        %v890 = vmul.f32 %v885, %v840
        %v891 = vpack.c.bf16 %v315, %v315
        %v892 = vpack.c.bf16 %v380, %v380
        %v893 = vpack.c.bf16 %v445, %v445
        %v895 = vsel %vm274, %v891, 0
        %v898 = vsel %vm274, %v892, 0
        %900 = vmatprep.subr.bf16.mxu0 0
        %901 = vmatpush1.bf16.xpose.msra.mxu0 0
        %902 = vmatprep.subr.bf16.mxu0 0
        %903 = vmatpush1.bf16.xpose.msra.mxu0 0
        %904 = vmatprep.subr.bf16.mxu0 0
        %905 = vmatpush1.bf16.xpose.msra.mxu0 0
        %906 = vmatprep.subr.bf16.mxu0 0
        %907 = vmatpush1.bf16.xpose.msra.mxu0 0
        %908 = vmatprep.subr.bf16.mxu0 0
        %909 = vmatpush1.bf16.xpose.msra.mxu0 0
        %910 = vmatprep.subr.bf16.mxu0 0
        %911 = vmatpush1.bf16.xpose.msra.mxu0 0
        %912 = vmatprep.subr.bf16.mxu0 0
        %913 = vmatpush1.bf16.xpose.msra.mxu0 0
        %914 = vmatprep.subr.bf16.mxu0 0
        %915 = vmatpush1.bf16.xpose.msra.mxu0 %v898
        %916 = vmatprep.subr.bf16.mxu0 0
        %917 = vmatpush2.bf16.xpose.msra.mxu0 0
        %918 = vmatprep.subr.bf16.mxu0 0
        %919 = vmatpush2.bf16.xpose.msra.mxu0 0
        %920 = vmatprep.subr.bf16.mxu0 0
        %921 = vmatpush2.bf16.xpose.msra.mxu0 0
        %922 = vmatprep.subr.bf16.mxu0 0
        %923 = vmatpush2.bf16.xpose.msra.mxu0 0
        %924 = vmatprep.subr.bf16.mxu0 0
        %925 = vmatpush2.bf16.xpose.msra.mxu0 0
        %926 = vmatprep.subr.bf16.mxu0 0
        %927 = vmatpush2.bf16.xpose.msra.mxu0 0
        %928 = vmatprep.subr.bf16.mxu0 0
        %929 = vmatpush2.bf16.xpose.msra.mxu0 0
        %930 = vmatprep.subr.bf16.mxu0 0
        %931 = vmatpush2.bf16.xpose.msra.mxu0 0
        %932 = vmatprep.mubr.bf16.mxu0 0
        %933 = vmatmul.mubr.bf16.gmra.mxu0 %v895
        %v934 = vpop.f32.mrf.mxu0
        %v935 = vadd.f32 0.0, %v934
        %v936 = vpop.f32.mrf.mxu0
        %v937 = vpop.f32.mrf.mxu0
        %v938 = vpop.f32.mrf.mxu0
        %939 = vdwg.mxu0
        %v940 = vsel %vm498, %v935, -inf
        %941 = vmax.xlane.f32.xlu0 %v940
        %v942 = vpop.xlane.xlu0 %941
        %v943 = vsub.f32 %v935, %v942
        %v944 = vmul.f32 %v943, 1.442695
        %v945 = vpow.pop %v944
        %v946 = vsel %vm498, %v945, 0.0
        %947 = vadd.xlane.f32.xlu0 %v946
        %v948 = vpop.xlane.xlu0 %947
        %v949 = vrcp.pop %v948
        %v950 = vpack.c.bf16 %v945, %v945
        %v952 = vsel %vm498, %v950, 0
        %v955 = vsel %vm513, %v893, 0
        %957 = vmatprep.subr.bf16.mxu0 0
        %958 = vmatpush1.bf16.msra.mxu0 0
        %959 = vmatprep.subr.bf16.mxu0 0
        %960 = vmatpush1.bf16.msra.mxu0 0
        %961 = vmatprep.subr.bf16.mxu0 0
        %962 = vmatpush1.bf16.msra.mxu0 0
        %963 = vmatprep.subr.bf16.mxu0 0
        %964 = vmatpush1.bf16.msra.mxu0 0
        %965 = vmatprep.subr.bf16.mxu0 0
        %966 = vmatpush1.bf16.msra.mxu0 0
        %967 = vmatprep.subr.bf16.mxu0 0
        %968 = vmatpush1.bf16.msra.mxu0 0
        %969 = vmatprep.subr.bf16.mxu0 0
        %970 = vmatpush1.bf16.msra.mxu0 0
        %971 = vmatprep.subr.bf16.mxu0 0
        %972 = vmatpush1.bf16.msra.mxu0 %v955
        %973 = vmatprep.subr.bf16.mxu0 0
        %974 = vmatpush2.bf16.msra.mxu0 0
        %975 = vmatprep.subr.bf16.mxu0 0
        %976 = vmatpush2.bf16.msra.mxu0 0
        %977 = vmatprep.subr.bf16.mxu0 0
        %978 = vmatpush2.bf16.msra.mxu0 0
        %979 = vmatprep.subr.bf16.mxu0 0
        %980 = vmatpush2.bf16.msra.mxu0 0
        %981 = vmatprep.subr.bf16.mxu0 0
        %982 = vmatpush2.bf16.msra.mxu0 0
        %983 = vmatprep.subr.bf16.mxu0 0
        %984 = vmatpush2.bf16.msra.mxu0 0
        %985 = vmatprep.subr.bf16.mxu0 0
        %986 = vmatpush2.bf16.msra.mxu0 0
        %987 = vmatprep.subr.bf16.mxu0 0
        %988 = vmatpush2.bf16.msra.mxu0 0
        %989 = vmatprep.mubr.bf16.mxu0 0
        %990 = vmatmul.mubr.bf16.gmra.mxu0 %v952
        %v991 = vpop.f32.mrf.mxu0
        %v992 = vadd.f32 0.0, %v991
        %v993 = vpop.f32.mrf.mxu0
        %v994 = vpop.f32.mrf.mxu0
        %v995 = vpop.f32.mrf.mxu0
        %996 = vdwg.mxu0
        %v997 = vmul.f32 %v992, %v949
        %999 = vrot.lane.b32.xlu0 %v891, 96
        %v1000 = vpop.permute.xlu0 %999
        %1002 = vrot.lane.b32.xlu0 %v892, 96
        %v1003 = vpop.permute.xlu0 %1002
        %v1005 = vsel %vm274, %v1000, 0
        %v1008 = vsel %vm274, %v1003, 0
        %1010 = vmatprep.subr.bf16.mxu0 0
        %1011 = vmatpush1.bf16.xpose.msra.mxu0 0
        %1012 = vmatprep.subr.bf16.mxu0 0
        %1013 = vmatpush1.bf16.xpose.msra.mxu0 0
        %1014 = vmatprep.subr.bf16.mxu0 0
        %1015 = vmatpush1.bf16.xpose.msra.mxu0 0
        %1016 = vmatprep.subr.bf16.mxu0 0
        %1017 = vmatpush1.bf16.xpose.msra.mxu0 0
        %1018 = vmatprep.subr.bf16.mxu0 0
        %1019 = vmatpush1.bf16.xpose.msra.mxu0 0
        %1020 = vmatprep.subr.bf16.mxu0 0
        %1021 = vmatpush1.bf16.xpose.msra.mxu0 0
        %1022 = vmatprep.subr.bf16.mxu0 0
        %1023 = vmatpush1.bf16.xpose.msra.mxu0 0
        %1024 = vmatprep.subr.bf16.mxu0 0
        %1025 = vmatpush1.bf16.xpose.msra.mxu0 %v1008
        %1026 = vmatprep.subr.bf16.mxu0 0
        %1027 = vmatpush2.bf16.xpose.msra.mxu0 0
        %1028 = vmatprep.subr.bf16.mxu0 0
        %1029 = vmatpush2.bf16.xpose.msra.mxu0 0
        %1030 = vmatprep.subr.bf16.mxu0 0
        %1031 = vmatpush2.bf16.xpose.msra.mxu0 0
        %1032 = vmatprep.subr.bf16.mxu0 0
        %1033 = vmatpush2.bf16.xpose.msra.mxu0 0
        %1034 = vmatprep.subr.bf16.mxu0 0
        %1035 = vmatpush2.bf16.xpose.msra.mxu0 0
        %1036 = vmatprep.subr.bf16.mxu0 0
        %1037 = vmatpush2.bf16.xpose.msra.mxu0 0
        %1038 = vmatprep.subr.bf16.mxu0 0
        %1039 = vmatpush2.bf16.xpose.msra.mxu0 0
        %1040 = vmatprep.subr.bf16.mxu0 0
        %1041 = vmatpush2.bf16.xpose.msra.mxu0 0
        %1042 = vmatprep.mubr.bf16.mxu0 0
        %1043 = vmatmul.mubr.bf16.gmra.mxu0 %v1005
        %v1044 = vpop.f32.mrf.mxu0
        %v1045 = vadd.f32 0.0, %v1044
        %v1046 = vpop.f32.mrf.mxu0
        %v1047 = vpop.f32.mrf.mxu0
        %v1048 = vpop.f32.mrf.mxu0
        %1049 = vdwg.mxu0
        %v1050 = vsel %vm498, %v1045, -inf
        %1051 = vmax.xlane.f32.xlu0 %v1050
        %v1052 = vpop.xlane.xlu0 %1051
        %v1053 = vsub.f32 %v1045, %v1052
        %v1054 = vmul.f32 %v1053, 1.442695
        %v1055 = vpow.pop %v1054
        %v1056 = vsel %vm498, %v1055, 0.0
        %1057 = vadd.xlane.f32.xlu0 %v1056
        %v1058 = vpop.xlane.xlu0 %1057
        %v1059 = vrcp.pop %v1058
        %v1060 = vpack.c.bf16 %v1055, %v1055
        %1062 = vrot.lane.b32.xlu0 %v893, 96
        %v1063 = vpop.permute.xlu0 %1062
        %v1065 = vsel %vm498, %v1060, 0
        %v1068 = vsel %vm513, %v1063, 0
        %1070 = vmatprep.subr.bf16.mxu0 0
        %1071 = vmatpush1.bf16.msra.mxu0 0
        %1072 = vmatprep.subr.bf16.mxu0 0
        %1073 = vmatpush1.bf16.msra.mxu0 0
        %1074 = vmatprep.subr.bf16.mxu0 0
        %1075 = vmatpush1.bf16.msra.mxu0 0
        %1076 = vmatprep.subr.bf16.mxu0 0
        %1077 = vmatpush1.bf16.msra.mxu0 0
        %1078 = vmatprep.subr.bf16.mxu0 0
        %1079 = vmatpush1.bf16.msra.mxu0 0
        %1080 = vmatprep.subr.bf16.mxu0 0
        %1081 = vmatpush1.bf16.msra.mxu0 0
        %1082 = vmatprep.subr.bf16.mxu0 0
        %1083 = vmatpush1.bf16.msra.mxu0 0
        %1084 = vmatprep.subr.bf16.mxu0 0
        %1085 = vmatpush1.bf16.msra.mxu0 %v1068
        %1086 = vmatprep.subr.bf16.mxu0 0
        %1087 = vmatpush2.bf16.msra.mxu0 0
        %1088 = vmatprep.subr.bf16.mxu0 0
        %1089 = vmatpush2.bf16.msra.mxu0 0
        %1090 = vmatprep.subr.bf16.mxu0 0
        %1091 = vmatpush2.bf16.msra.mxu0 0
        %1092 = vmatprep.subr.bf16.mxu0 0
        %1093 = vmatpush2.bf16.msra.mxu0 0
        %1094 = vmatprep.subr.bf16.mxu0 0
        %1095 = vmatpush2.bf16.msra.mxu0 0
        %1096 = vmatprep.subr.bf16.mxu0 0
        %1097 = vmatpush2.bf16.msra.mxu0 0
        %1098 = vmatprep.subr.bf16.mxu0 0
        %1099 = vmatpush2.bf16.msra.mxu0 0
        %1100 = vmatprep.subr.bf16.mxu0 0
        %1101 = vmatpush2.bf16.msra.mxu0 0
        %1102 = vmatprep.mubr.bf16.mxu0 0
        %1103 = vmatmul.mubr.bf16.gmra.mxu0 %v1065
        %v1104 = vpop.f32.mrf.mxu0
        %v1105 = vadd.f32 0.0, %v1104
        %v1106 = vpop.f32.mrf.mxu0
        %v1107 = vpop.f32.mrf.mxu0
        %v1108 = vpop.f32.mrf.mxu0
        %1109 = vdwg.mxu0
        %v1110 = vmul.f32 %v1105, %v1059
        %1111 = vrot.lane.b32.xlu0 %v891, 64
        %v1112 = vpop.permute.xlu0 %1111
        %1113 = vrot.lane.b32.xlu0 %v892, 64
        %v1114 = vpop.permute.xlu0 %1113
        %v1116 = vsel %vm274, %v1112, 0
        %v1119 = vsel %vm274, %v1114, 0
        %1121 = vmatprep.subr.bf16.mxu0 0
        %1122 = vmatpush1.bf16.xpose.msra.mxu0 0
        %1123 = vmatprep.subr.bf16.mxu0 0
        %1124 = vmatpush1.bf16.xpose.msra.mxu0 0
        %1125 = vmatprep.subr.bf16.mxu0 0
        %1126 = vmatpush1.bf16.xpose.msra.mxu0 0
        %1127 = vmatprep.subr.bf16.mxu0 0
        %1128 = vmatpush1.bf16.xpose.msra.mxu0 0
        %1129 = vmatprep.subr.bf16.mxu0 0
        %1130 = vmatpush1.bf16.xpose.msra.mxu0 0
        %1131 = vmatprep.subr.bf16.mxu0 0
        %1132 = vmatpush1.bf16.xpose.msra.mxu0 0
        %1133 = vmatprep.subr.bf16.mxu0 0
        %1134 = vmatpush1.bf16.xpose.msra.mxu0 0
        %1135 = vmatprep.subr.bf16.mxu0 0
        %1136 = vmatpush1.bf16.xpose.msra.mxu0 %v1119
        %1137 = vmatprep.subr.bf16.mxu0 0
        %1138 = vmatpush2.bf16.xpose.msra.mxu0 0
        %1139 = vmatprep.subr.bf16.mxu0 0
        %1140 = vmatpush2.bf16.xpose.msra.mxu0 0
        %1141 = vmatprep.subr.bf16.mxu0 0
        %1142 = vmatpush2.bf16.xpose.msra.mxu0 0
        %1143 = vmatprep.subr.bf16.mxu0 0
        %1144 = vmatpush2.bf16.xpose.msra.mxu0 0
        %1145 = vmatprep.subr.bf16.mxu0 0
        %1146 = vmatpush2.bf16.xpose.msra.mxu0 0
        %1147 = vmatprep.subr.bf16.mxu0 0
        %1148 = vmatpush2.bf16.xpose.msra.mxu0 0
        %1149 = vmatprep.subr.bf16.mxu0 0
        %1150 = vmatpush2.bf16.xpose.msra.mxu0 0
        %1151 = vmatprep.subr.bf16.mxu0 0
        %1152 = vmatpush2.bf16.xpose.msra.mxu0 0
        %1153 = vmatprep.mubr.bf16.mxu0 0
        %1154 = vmatmul.mubr.bf16.gmra.mxu0 %v1116
        %v1155 = vpop.f32.mrf.mxu0
        %v1156 = vadd.f32 0.0, %v1155
        %v1157 = vpop.f32.mrf.mxu0
        %v1158 = vpop.f32.mrf.mxu0
        %v1159 = vpop.f32.mrf.mxu0
        %1160 = vdwg.mxu0
        %v1161 = vsel %vm498, %v1156, -inf
        %1162 = vmax.xlane.f32.xlu0 %v1161
        %v1163 = vpop.xlane.xlu0 %1162
        %v1164 = vsub.f32 %v1156, %v1163
        %v1165 = vmul.f32 %v1164, 1.442695
        %v1166 = vpow.pop %v1165
        %v1167 = vsel %vm498, %v1166, 0.0
        %1168 = vadd.xlane.f32.xlu0 %v1167
        %v1169 = vpop.xlane.xlu0 %1168
        %v1170 = vrcp.pop %v1169
        %v1171 = vpack.c.bf16 %v1166, %v1166
        %1172 = vrot.lane.b32.xlu0 %v893, 64
        %v1173 = vpop.permute.xlu0 %1172
        %v1175 = vsel %vm498, %v1171, 0
        %v1178 = vsel %vm513, %v1173, 0
        %1180 = vmatprep.subr.bf16.mxu0 0
        %1181 = vmatpush1.bf16.msra.mxu0 0
        %1182 = vmatprep.subr.bf16.mxu0 0
        %1183 = vmatpush1.bf16.msra.mxu0 0
        %1184 = vmatprep.subr.bf16.mxu0 0
        %1185 = vmatpush1.bf16.msra.mxu0 0
        %1186 = vmatprep.subr.bf16.mxu0 0
        %1187 = vmatpush1.bf16.msra.mxu0 0
        %1188 = vmatprep.subr.bf16.mxu0 0
        %1189 = vmatpush1.bf16.msra.mxu0 0
        %1190 = vmatprep.subr.bf16.mxu0 0
        %1191 = vmatpush1.bf16.msra.mxu0 0
        %1192 = vmatprep.subr.bf16.mxu0 0
        %1193 = vmatpush1.bf16.msra.mxu0 0
        %1194 = vmatprep.subr.bf16.mxu0 0
        %1195 = vmatpush1.bf16.msra.mxu0 %v1178
        %1196 = vmatprep.subr.bf16.mxu0 0
        %1197 = vmatpush2.bf16.msra.mxu0 0
        %1198 = vmatprep.subr.bf16.mxu0 0
        %1199 = vmatpush2.bf16.msra.mxu0 0
        %1200 = vmatprep.subr.bf16.mxu0 0
        %1201 = vmatpush2.bf16.msra.mxu0 0
        %1202 = vmatprep.subr.bf16.mxu0 0
        %1203 = vmatpush2.bf16.msra.mxu0 0
        %1204 = vmatprep.subr.bf16.mxu0 0
        %1205 = vmatpush2.bf16.msra.mxu0 0
        %1206 = vmatprep.subr.bf16.mxu0 0
        %1207 = vmatpush2.bf16.msra.mxu0 0
        %1208 = vmatprep.subr.bf16.mxu0 0
        %1209 = vmatpush2.bf16.msra.mxu0 0
        %1210 = vmatprep.subr.bf16.mxu0 0
        %1211 = vmatpush2.bf16.msra.mxu0 0
        %1212 = vmatprep.mubr.bf16.mxu0 0
        %1213 = vmatmul.mubr.bf16.gmra.mxu0 %v1175
        %v1214 = vpop.f32.mrf.mxu0
        %v1215 = vadd.f32 0.0, %v1214
        %v1216 = vpop.f32.mrf.mxu0
        %v1217 = vpop.f32.mrf.mxu0
        %v1218 = vpop.f32.mrf.mxu0
        %1219 = vdwg.mxu0
        %v1220 = vmul.f32 %v1215, %v1170
        %1221 = vrot.lane.b32.xlu0 %v891, 32
        %v1222 = vpop.permute.xlu0 %1221
        %1223 = vrot.lane.b32.xlu0 %v892, 32
        %v1224 = vpop.permute.xlu0 %1223
        %v1226 = vsel %vm274, %v1222, 0
        %v1229 = vsel %vm274, %v1224, 0
        %1231 = vmatprep.subr.bf16.mxu0 0
        %1232 = vmatpush1.bf16.xpose.msra.mxu0 0
        %1233 = vmatprep.subr.bf16.mxu0 0
        %1234 = vmatpush1.bf16.xpose.msra.mxu0 0
        %1235 = vmatprep.subr.bf16.mxu0 0
        %1236 = vmatpush1.bf16.xpose.msra.mxu0 0
        %1237 = vmatprep.subr.bf16.mxu0 0
        %1238 = vmatpush1.bf16.xpose.msra.mxu0 0
        %1239 = vmatprep.subr.bf16.mxu0 0
        %1240 = vmatpush1.bf16.xpose.msra.mxu0 0
        %1241 = vmatprep.subr.bf16.mxu0 0
        %1242 = vmatpush1.bf16.xpose.msra.mxu0 0
        %1243 = vmatprep.subr.bf16.mxu0 0
        %1244 = vmatpush1.bf16.xpose.msra.mxu0 0
        %1245 = vmatprep.subr.bf16.mxu0 0
        %1246 = vmatpush1.bf16.xpose.msra.mxu0 %v1229
        %1247 = vmatprep.subr.bf16.mxu0 0
        %1248 = vmatpush2.bf16.xpose.msra.mxu0 0
        %1249 = vmatprep.subr.bf16.mxu0 0
        %1250 = vmatpush2.bf16.xpose.msra.mxu0 0
        %1251 = vmatprep.subr.bf16.mxu0 0
        %1252 = vmatpush2.bf16.xpose.msra.mxu0 0
        %1253 = vmatprep.subr.bf16.mxu0 0
        %1254 = vmatpush2.bf16.xpose.msra.mxu0 0
        %1255 = vmatprep.subr.bf16.mxu0 0
        %1256 = vmatpush2.bf16.xpose.msra.mxu0 0
        %1257 = vmatprep.subr.bf16.mxu0 0
        %1258 = vmatpush2.bf16.xpose.msra.mxu0 0
        %1259 = vmatprep.subr.bf16.mxu0 0
        %1260 = vmatpush2.bf16.xpose.msra.mxu0 0
        %1261 = vmatprep.subr.bf16.mxu0 0
        %1262 = vmatpush2.bf16.xpose.msra.mxu0 0
        %1263 = vmatprep.mubr.bf16.mxu0 0
        %1264 = vmatmul.mubr.bf16.gmra.mxu0 %v1226
        %v1265 = vpop.f32.mrf.mxu0
        %v1266 = vadd.f32 0.0, %v1265
        %v1267 = vpop.f32.mrf.mxu0
        %v1268 = vpop.f32.mrf.mxu0
        %v1269 = vpop.f32.mrf.mxu0
        %1270 = vdwg.mxu0
        %v1271 = vsel %vm498, %v1266, -inf
        %1272 = vmax.xlane.f32.xlu0 %v1271
        %v1273 = vpop.xlane.xlu0 %1272
        %v1274 = vsub.f32 %v1266, %v1273
        %v1275 = vmul.f32 %v1274, 1.442695
        %v1276 = vpow.pop %v1275
        %v1277 = vsel %vm498, %v1276, 0.0
        %1278 = vadd.xlane.f32.xlu0 %v1277
        %v1279 = vpop.xlane.xlu0 %1278
        %v1280 = vrcp.pop %v1279
        %v1281 = vpack.c.bf16 %v1276, %v1276
        %1282 = vrot.lane.b32.xlu0 %v893, 32
        %v1283 = vpop.permute.xlu0 %1282
        %v1285 = vsel %vm498, %v1281, 0
        %v1288 = vsel %vm513, %v1283, 0
        %1290 = vmatprep.subr.bf16.mxu0 0
        %1291 = vmatpush1.bf16.msra.mxu0 0
        %1292 = vmatprep.subr.bf16.mxu0 0
        %1293 = vmatpush1.bf16.msra.mxu0 0
        %1294 = vmatprep.subr.bf16.mxu0 0
        %1295 = vmatpush1.bf16.msra.mxu0 0
        %1296 = vmatprep.subr.bf16.mxu0 0
        %1297 = vmatpush1.bf16.msra.mxu0 0
        %1298 = vmatprep.subr.bf16.mxu0 0
        %1299 = vmatpush1.bf16.msra.mxu0 0
        %1300 = vmatprep.subr.bf16.mxu0 0
        %1301 = vmatpush1.bf16.msra.mxu0 0
        %1302 = vmatprep.subr.bf16.mxu0 0
        %1303 = vmatpush1.bf16.msra.mxu0 0
        %1304 = vmatprep.subr.bf16.mxu0 0
        %1305 = vmatpush1.bf16.msra.mxu0 %v1288
        %1306 = vmatprep.subr.bf16.mxu0 0
        %1307 = vmatpush2.bf16.msra.mxu0 0
        %1308 = vmatprep.subr.bf16.mxu0 0
        %1309 = vmatpush2.bf16.msra.mxu0 0
        %1310 = vmatprep.subr.bf16.mxu0 0
        %1311 = vmatpush2.bf16.msra.mxu0 0
        %1312 = vmatprep.subr.bf16.mxu0 0
        %1313 = vmatpush2.bf16.msra.mxu0 0
        %1314 = vmatprep.subr.bf16.mxu0 0
        %1315 = vmatpush2.bf16.msra.mxu0 0
        %1316 = vmatprep.subr.bf16.mxu0 0
        %1317 = vmatpush2.bf16.msra.mxu0 0
        %1318 = vmatprep.subr.bf16.mxu0 0
        %1319 = vmatpush2.bf16.msra.mxu0 0
        %1320 = vmatprep.subr.bf16.mxu0 0
        %1321 = vmatpush2.bf16.msra.mxu0 0
        %1322 = vmatprep.mubr.bf16.mxu0 0
        %1323 = vmatmul.mubr.bf16.gmra.mxu0 %v1285
        %v1324 = vpop.f32.mrf.mxu0
        %v1325 = vadd.f32 0.0, %v1324
        %v1326 = vpop.f32.mrf.mxu0
        %v1327 = vpop.f32.mrf.mxu0
        %v1328 = vpop.f32.mrf.mxu0
        %1329 = vdwg.mxu0
        %v1330 = vmul.f32 %v1325, %v1280
        %1332 = vrot.lane.b32.xlu0 %v670, 32
        %v1333 = vpop.permute.xlu0 %1332
        %1336 = vrot.lane.b32.xlu0 %v780, 64
        %v1337 = vpop.permute.xlu0 %1336
        %1340 = vrot.lane.b32.xlu0 %v890, 96
        %v1341 = vpop.permute.xlu0 %1340
        %1344 = vrot.lane.b32.xlu0 %v1110, 32
        %v1345 = vpop.permute.xlu0 %1344
        %1348 = vrot.lane.b32.xlu0 %v1220, 64
        %v1349 = vpop.permute.xlu0 %1348
        %1352 = vrot.lane.b32.xlu0 %v1330, 96
        %v1353 = vpop.permute.xlu0 %1352
        %v1355 = vsel %vm274, %v557, %v1333
        %vm1356 = vcmask 523264
        %v1357 = vsel %vm1356, %v1355, %v1337
        %vm1358 = vcmask 785408
        %v1359 = vsel %vm1358, %v1357, %v1341
        %v1360 = vsel %vm274, %v997, %v1345
        %v1361 = vsel %vm1356, %v1360, %v1349
        %v1362 = vsel %vm1358, %v1361, %v1353
        %v1363 = vpack.c.bf16 %v1359, %v1359
        %v1364 = vpack.c.bf16 %v1362, %v1362
        %v1365 = vld [vmem:[%s4] sm:$0xf]
        %v1366 = vld [vmem:[%s4 + $0x4] sm:$0xf]
        %v1367 = vld [vmem:[%s4 + $0x8] sm:$0xf]
        %v1368 = vld [vmem:[%s4 + $0xc] sm:$0xf]
        %v1369 = vld [vmem:[%s4 + $0x10] sm:$0xf]
        %v1370 = vld [vmem:[%s4 + $0x14] sm:$0xf]
        %v1371 = vld [vmem:[%s4 + $0x18] sm:$0xf]
        %v1372 = vld [vmem:[%s4 + $0x1c] sm:$0xf]
        %v1373 = vld [vmem:[%s4 + $0x20] sm:$0xf]
        %v1374 = vld [vmem:[%s4 + $0x24] sm:$0xf]
        %v1375 = vld [vmem:[%s4 + $0x28] sm:$0xf]
        %v1376 = vld [vmem:[%s4 + $0x2c] sm:$0xf]
        %v1377 = vld [vmem:[%s4 + $0x30] sm:$0xf]
        %v1378 = vld [vmem:[%s4 + $0x34] sm:$0xf]
        %v1379 = vld [vmem:[%s4 + $0x38] sm:$0xf]
        %v1380 = vld [vmem:[%s4 + $0x3c] sm:$0xf]
        %v1381 = vld [vmem:[%s4 + $0x40] sm:$0xf]
        %v1382 = vld [vmem:[%s4 + $0x44] sm:$0xf]
        %v1383 = vld [vmem:[%s4 + $0x48] sm:$0xf]
        %v1384 = vld [vmem:[%s4 + $0x4c] sm:$0xf]
        %v1385 = vld [vmem:[%s4 + $0x50] sm:$0xf]
        %v1386 = vld [vmem:[%s4 + $0x54] sm:$0xf]
        %v1387 = vld [vmem:[%s4 + $0x58] sm:$0xf]
        %v1388 = vld [vmem:[%s4 + $0x5c] sm:$0xf]
        %v1389 = vld [vmem:[%s4 + $0x60] sm:$0xf]
        %v1390 = vld [vmem:[%s4 + $0x64] sm:$0xf]
        %v1391 = vld [vmem:[%s4 + $0x68] sm:$0xf]
        %v1392 = vld [vmem:[%s4 + $0x6c] sm:$0xf]
        %v1393 = vld [vmem:[%s4 + $0x70] sm:$0xf]
        %v1394 = vld [vmem:[%s4 + $0x74] sm:$0xf]
        %v1395 = vld [vmem:[%s4 + $0x78] sm:$0xf]
        %v1396 = vld [vmem:[%s4 + $0x7c] sm:$0xf]
        %v1397 = vld [vmem:[%s5] sm:$0x1]
        %v1399 = vlaneseq
        %v1400 = vshrl.u32 %v1399, 7
        %v1401 = vsub.s32 0, %v1400
        %v1402 = vrot.slane %v1397, %v1401
        %v1436 = vunpack.c.l.b16 %v1365
        %v1437 = vunpack.c.l.b16 %v1366
        %v1438 = vunpack.c.l.b16 %v1367
        %v1439 = vunpack.c.l.b16 %v1368
        %v1440 = vunpack.c.l.b16 %v1369
        %v1441 = vunpack.c.l.b16 %v1370
        %v1442 = vunpack.c.l.b16 %v1371
        %v1443 = vunpack.c.l.b16 %v1372
        %v1444 = vunpack.c.l.b16 %v1373
        %v1445 = vunpack.c.l.b16 %v1374
        %v1446 = vunpack.c.l.b16 %v1375
        %v1447 = vunpack.c.l.b16 %v1376
        %v1448 = vunpack.c.l.b16 %v1377
        %v1449 = vunpack.c.l.b16 %v1378
        %v1450 = vunpack.c.l.b16 %v1379
        %v1451 = vunpack.c.l.b16 %v1380
        %v1452 = vunpack.c.l.b16 %v1381
        %v1453 = vunpack.c.l.b16 %v1382
        %v1454 = vunpack.c.l.b16 %v1383
        %v1455 = vunpack.c.l.b16 %v1384
        %v1456 = vunpack.c.l.b16 %v1385
        %v1457 = vunpack.c.l.b16 %v1386
        %v1458 = vunpack.c.l.b16 %v1387
        %v1459 = vunpack.c.l.b16 %v1388
        %v1460 = vunpack.c.l.b16 %v1389
        %v1461 = vunpack.c.l.b16 %v1390
        %v1462 = vunpack.c.l.b16 %v1391
        %v1463 = vunpack.c.l.b16 %v1392
        %v1464 = vunpack.c.l.b16 %v1393
        %v1465 = vunpack.c.l.b16 %v1394
        %v1466 = vunpack.c.l.b16 %v1395
        %v1467 = vunpack.c.l.b16 %v1396
        %v1468 = vpack.c.b16 %v1437, %v1436
        %v1469 = vpack.c.b16 %v1439, %v1438
        %v1470 = vpack.c.b16 %v1441, %v1440
        %v1471 = vpack.c.b16 %v1443, %v1442
        %v1472 = vpack.c.b16 %v1445, %v1444
        %v1473 = vpack.c.b16 %v1447, %v1446
        %v1474 = vpack.c.b16 %v1449, %v1448
        %v1475 = vpack.c.b16 %v1451, %v1450
        %v1476 = vpack.c.b16 %v1453, %v1452
        %v1477 = vpack.c.b16 %v1455, %v1454
        %v1478 = vpack.c.b16 %v1457, %v1456
        %v1479 = vpack.c.b16 %v1459, %v1458
        %v1480 = vpack.c.b16 %v1461, %v1460
        %v1481 = vpack.c.b16 %v1463, %v1462
        %v1482 = vpack.c.b16 %v1465, %v1464
        %v1483 = vpack.c.b16 %v1467, %v1466
        %1500 = vmatprep.subr.bf16.mxu0 0
        %1501 = vmatpush1.bf16.msra.mxu0 %v1475
        %1502 = vmatprep.subr.bf16.mxu0 0
        %1503 = vmatpush1.bf16.msra.mxu0 %v1474
        %1504 = vmatprep.subr.bf16.mxu0 0
        %1505 = vmatpush1.bf16.msra.mxu0 %v1473
        %1506 = vmatprep.subr.bf16.mxu0 0
        %1507 = vmatpush1.bf16.msra.mxu0 %v1472
        %1508 = vmatprep.subr.bf16.mxu0 0
        %1509 = vmatpush1.bf16.msra.mxu0 %v1471
        %1510 = vmatprep.subr.bf16.mxu0 0
        %1511 = vmatpush1.bf16.msra.mxu0 %v1470
        %1512 = vmatprep.subr.bf16.mxu0 0
        %1513 = vmatpush1.bf16.msra.mxu0 %v1469
        %1514 = vmatprep.subr.bf16.mxu0 0
        %1515 = vmatpush1.bf16.msra.mxu0 %v1468
        %1516 = vmatprep.subr.bf16.mxu0 0
        %1517 = vmatpush2.bf16.msra.mxu0 %v1483
        %1518 = vmatprep.subr.bf16.mxu0 0
        %1519 = vmatpush2.bf16.msra.mxu0 %v1482
        %1520 = vmatprep.subr.bf16.mxu0 0
        %1521 = vmatpush2.bf16.msra.mxu0 %v1481
        %1522 = vmatprep.subr.bf16.mxu0 0
        %1523 = vmatpush2.bf16.msra.mxu0 %v1480
        %1524 = vmatprep.subr.bf16.mxu0 0
        %1525 = vmatpush2.bf16.msra.mxu0 %v1479
        %1526 = vmatprep.subr.bf16.mxu0 0
        %1527 = vmatpush2.bf16.msra.mxu0 %v1478
        %1528 = vmatprep.subr.bf16.mxu0 0
        %1529 = vmatpush2.bf16.msra.mxu0 %v1477
        %1530 = vmatprep.subr.bf16.mxu0 0
        %1531 = vmatpush2.bf16.msra.mxu0 %v1476
        %1532 = vmatprep.mubr.bf16.mxu0 %v1364
        %1533 = vmatmul.mubr.bf16.gmra.mxu0 %v1363
        %v1534 = vpop.f32.mrf.mxu0
        %v1535 = vadd.f32 %v1402, %v1534
        %v1536 = vpop.f32.mrf.mxu0
        %v1537 = vpop.f32.mrf.mxu0
        %v1538 = vpop.f32.mrf.mxu0
        %1539 = vdwg.mxu0
        %1540 = vst.msk [vmem:[%s242] sm:$0xff] %vm274, %v1535
        %s1541 = sand.u32 %s159, 1
        %s1542 = scalar_lea.sflag [#allocation3], %s1541
        %s1543 = sand.u32 %s159, 1
        %s1544 = smul.addr %s1543, 8
        %s1545 = scalar_lea.vmem [#allocation2], %s1544
        // Predicated region
        $region45: #{tpu_custom_call.1} parent=43 // pred_check
          %p1546 = pneg %p169
        $region46: #{tpu_custom_call.1} parent=43 // pred_check_branch
          %1548 = sbr.rel (%p1546) target = $region48
        $region47: #{tpu_custom_call.1} parent=43 // pred_region
          %s1550 = ssub.s32 128, 128
          %1551 = vsyncadd %s1542, %s1550
          %s1552 = smul.addr %s20, 128
          %s1553 = scalar_lea.hbm %s6, %s1552
          %s1555 = sshll.u32 %s1545, 4
          %s1556 = int_to_ptr.vmem [resolvable:$true] %s1555
          %1558 = dma.vmem_to_hbm [thread:$0]  %s1556, 128, %s1553, %s1542
        $region48: #{tpu_custom_call.1} parent=43 // pred_fallthru
          _
      $region44: #{tpu_custom_call.1} parent=5 // pred_fallthru
        _
      %p1559 = scmp.le.s32.totalorder 2, %s15
      // Predicated region
      $region49: #{tpu_custom_call.1} parent=5 // pred_check
        %p1560 = pneg %p1559
      $region50: #{tpu_custom_call.1} parent=5 // pred_check_branch
        %1562 = sbr.rel (%p1560) target = $region52
      $region51: #{tpu_custom_call.1} parent=5 // pred_region
        %s1563 = ssub.s32 %s15, 2
        // Predicated region
        $region53: #{tpu_custom_call.1} parent=51 // pred_check
          %p1564 = pneg %p175
        $region54: #{tpu_custom_call.1} parent=51 // pred_check_branch
          %1566 = sbr.rel (%p1564) target = $region56
        $region55: #{tpu_custom_call.1} parent=51 // pred_region
          %s1567 = sand.u32 %s160, 1
          %s1568 = scalar_lea.sflag [#allocation3], %s1567
          %s1569 = sand.u32 %s160, 1
          %s1570 = smul.addr %s1569, 8
          %s1571 = scalar_lea.vmem [#allocation2], %s1570
          %1572 = dma.done %s1568, 128
        $region56: #{tpu_custom_call.1} parent=51 // pred_fallthru
          _
      $region52: #{tpu_custom_call.1} parent=5 // pred_fallthru
        _
    $region6: #{tpu_custom_call.1} parent=1 // loop_footer
      %s19 = sadd.s32 1, %s15
    $region7: #{tpu_custom_call.1} parent=1 // loop_footer_branch
      %14 = sbr.rel target = $region3
    $region8: #{tpu_custom_call.1} parent=1 // loop_exit
      _
    %1573 = vsyncpa [#allocation3], 1
    %s1574 = scalar_lea.sflag [#allocation3], 1
    %1575 = vsyncpa %s1574, 1

</llo_original>
